<compile_context>
chip_gen: v6e
topology: v6e:2x2x1
jax: 0.10.0
libtpu: 0.0.40
codegen_flags: <defaults>
</compile_context>

<pallas_src>
import functools

import numpy as np
import jax
import jax.numpy as jnp
from jax import lax
from jax.experimental import pallas as pl
from jax.experimental.pallas import tpu as pltpu


def _round_up(x, m):
    return (x + m - 1) // m * m


def openloop_gru_kernel(x_ref, wih_ref, whh_ref, bg_ref, bhn_ref, we_ref, be_ref,
                        y_ref, gx_scr, hs_scr, *, T, BP, K):
    """x_ref:   (T*BP, D)      time-major flattened inputs (batch padded to BP rows/step)
       wih_ref: (D, 3*HP)      fused input->gate weights (r|z|n), gate blocks 128-lane padded
       whh_ref: (HP, 3*HP)     fused hidden->gate weights (r|z|n)
       bg_ref:  (1, 3*HP)      combined gate bias: [b_ih_r+b_hh_r | b_ih_z+b_hh_z | b_ih_n]
       bhn_ref: (1, HP)        b_hh_n (must stay inside r * (h@W_hn + b_hh_n))
       we_ref:  (HP, HUMANP)   emission weight, be_ref: (1, HUMANP) emission bias
       y_ref:   (T*BP, HUMANP) output (emission only; residual added in XLA after)
       gx_scr:  (T*BP, 3*HP)   VMEM scratch for the hoisted input projection
       hs_scr:  (K*BP, HP)     VMEM scratch for one chunk of hidden states."""
    HP = whh_ref.shape[0]

    # --- hoisted input projection for ALL timesteps: one MXU op, biases folded ---
    gx_scr[...] = (jnp.dot(x_ref[...], wih_ref[...],
                           preferred_element_type=jnp.float32) + bg_ref[...])

    # hoisted broadcast (JAX does not CSE broadcast_in_dim; keep it off the critical path)
    b_hn_b = jnp.broadcast_to(bhn_ref[...], (BP, HP))

    def chunk(c, h):
        base = pl.multiple_of(c * (K * BP), K * BP)

        def step(s, h):
            off = pl.multiple_of(base + s * BP, BP)          # sublane-aligned row offset
            gx_t = gx_scr[pl.ds(off, BP), :]                 # (BP, 3*HP), biases included
            # w_hh re-loaded from VMEM per step: vld slot has slack, bounds vreg pressure
            gh = jnp.dot(h, whh_ref[...], preferred_element_type=jnp.float32)  # (BP, 3*HP)
            # gate order r, z, n (PyTorch nn.GRU convention); slices are vreg-aligned (HP%128==0)
            rz = jax.nn.sigmoid(gx_t[:, :2 * HP] + gh[:, :2 * HP])
            r = rz[:, :HP]
            z = rz[:, HP:]
            n = jnp.tanh(gx_t[:, 2 * HP:] + r * (gh[:, 2 * HP:] + b_hn_b))
            h_new = (1.0 - z) * n + z * h
            hs_scr[pl.ds(pl.multiple_of(s * BP, BP), BP), :] = h_new
            return h_new

        # h carried in vregs; unroll capped at K (<= 8) for LLO visibility w/o vreg blowup.
        h = lax.fori_loop(0, K, step, h, unroll=True)

        # chunked emission: (K*BP, HP) @ (HP, HUMANP) rides in free MXU slots while the
        # next chunk's recurrence proceeds; lane-dense (HUMANP % 128 == 0) store.
        y_ref[pl.ds(base, K * BP), :] = (
            jnp.dot(hs_scr[...], we_ref[...], preferred_element_type=jnp.float32)
            + be_ref[...]).astype(y_ref.dtype)
        return h

    lax.fori_loop(0, T // K, chunk, jnp.zeros((BP, HP), jnp.float32))


def open_loop_gru_forward(inputs, params):
    """inputs: (B, T, input_dim) float32, batch-first (like PyTorch). Returns (B, T, HUMAN)."""
    B, T, D = inputs.shape
    H = params["w_hh"].shape[-1]
    HUMAN = params["w_e"].shape[-1]
    assert HUMAN >= D, "this script implements the HUMAN_SIZE >= input_size residual branch"

    BP = _round_up(B, 8)            # 8 rows per timestep -> sublane-aligned per-step slices
    HP = _round_up(H, 128)          # 128-lane-aligned gate blocks
    HUMANP = _round_up(HUMAN, 128)  # lane-dense output store
    K = next(k for k in (8, 4, 2, 1) if T % k == 0)   # emission chunk / unroll cap

    # --- fuse + pad gate weights (r|z|n); fold biases.  Zero padding keeps the padded
    # hidden lanes exactly 0 through the recurrence (sigmoid(0)=.5, tanh(0)=0, h0=0). ---
    pad_g = lambda w: jnp.pad(w, ((0, 0), (0, HP - H)))                   # cols H -> HP
    w_ih_f = jnp.concatenate([pad_g(params["w_ih"][g]) for g in range(3)], axis=-1)
    w_hh_f = jnp.concatenate(
        [jnp.pad(params["w_hh"][g], ((0, HP - H), (0, HP - H))) for g in range(3)], axis=-1)
    b_ih, b_hh = params["b_ih"], params["b_hh"]
    pad_b = lambda b: jnp.pad(b, ((0, 0), (0, HP - H)))
    # b_hh_r/b_hh_z fold into the input-side bias; b_hh_n must stay inside r * (.)
    b_gates = jnp.concatenate([pad_b(b_ih[0] + b_hh[0]),
                               pad_b(b_ih[1] + b_hh[1]),
                               pad_b(b_ih[2])], axis=-1)                  # (1, 3*HP)
    b_hn = pad_b(b_hh[2])                                                 # (1, HP)
    w_e = jnp.pad(params["w_e"], ((0, HP - H), (0, HUMANP - HUMAN)))      # (HP, HUMANP)
    b_e = jnp.pad(params["b_e"], ((0, 0), (0, HUMANP - HUMAN)))           # (1, HUMANP)

    # time-major, batch padded to BP rows per step: row t*BP + b <-> (time t, batch b)
    x_tm = jnp.transpose(inputs, (1, 0, 2))                               # (T, B, D)
    x_tm = jnp.pad(x_tm, ((0, 0), (0, BP - B), (0, 0)))                   # (T, BP, D)
    x2 = x_tm.reshape(T * BP, D)

    # explicit VMEM budget sized from the actual footprint (v5e scoped default = 16 MiB)
    def _pb(shape):  # padded f32 bytes for a 2-D VMEM-resident array
        r, c = shape
        return 4 * _round_up(r, 8) * _round_up(c, 128)
    footprint = sum(_pb(s) for s in [
        (T * BP, D), (D, 3 * HP), (HP, 3 * HP), (1, 3 * HP), (1, HP),
        (HP, HUMANP), (1, HUMANP), (T * BP, HUMANP),           # I/O
        (T * BP, 3 * HP), (K * BP, HP)])                        # scratch
    vmem_limit = int(min(max(2 * footprint + (2 << 20), 8 << 20), 100 << 20))

    vmem = pl.BlockSpec(memory_space=pltpu.MemorySpace.VMEM)
    kernel = functools.partial(openloop_gru_kernel, T=T, BP=BP, K=K)
    # TODO(synk): for large T*BP (esp. v7x's 64 MiB VMEM) tile T with a grid + BlockSpec
    # pipelining (h carried in persistent scratch across an "arbitrary" time axis), and
    # add a parallel batch grid axis so v7x's second TensorCore gets independent rows.
    y2 = pl.pallas_call(
        kernel,
        out_shape=jax.ShapeDtypeStruct((T * BP, HUMANP), jnp.float32),
        in_specs=[vmem] * 7,
        out_specs=vmem,
        scratch_shapes=[pltpu.VMEM((T * BP, 3 * HP), jnp.float32),   # gx (all steps)
                        pltpu.VMEM((K * BP, HP), jnp.float32)],      # one hidden chunk
        compiler_params=pltpu.CompilerParams(vmem_limit_bytes=vmem_limit),
    )(x2, w_ih_f, w_hh_f, b_gates, b_hn, w_e, b_e)

    # drop padding, residual connection + layout back to batch-first (fuses in XLA).
    y = jnp.transpose(y2.reshape(T, BP, HUMANP)[:, :B, :HUMAN], (1, 0, 2))   # (B, T, HUMAN)
    y = y + jnp.pad(inputs, ((0, 0), (0, 0), (0, HUMAN - D)))
    return y


def ref_forward(inputs, params):
    """Pure-JAX reference mirroring PyTorch nn.GRU + Linear + residual."""
    B, T, D = inputs.shape
    HUMAN = params["w_e"].shape[-1]
    w_ih, w_hh = params["w_ih"], params["w_hh"]
    b_ih, b_hh = params["b_ih"], params["b_hh"]
    H = w_hh.shape[-1]
    x_tm = jnp.transpose(inputs, (1, 0, 2))

    def step(h, x_t):
        r = jax.nn.sigmoid(x_t @ w_ih[0] + b_ih[0] + h @ w_hh[0] + b_hh[0])
        z = jax.nn.sigmoid(x_t @ w_ih[1] + b_ih[1] + h @ w_hh[1] + b_hh[1])
        n = jnp.tanh(x_t @ w_ih[2] + b_ih[2] + r * (h @ w_hh[2] + b_hh[2]))
        h_new = (1.0 - z) * n + z * h
        return h_new, h_new

    _, hs = lax.scan(step, jnp.zeros((B, H), jnp.float32), x_tm)   # (T, B, H)
    y = hs @ params["w_e"] + params["b_e"]
    y = y + jnp.pad(x_tm, ((0, 0), (0, 0), (0, HUMAN - D)))
    return jnp.transpose(y, (1, 0, 2))


def init_params(key, input_dim, hidden, human_size):
    """Deterministic synthetic parameters (PyTorch-style uniform(-1/sqrt(H), 1/sqrt(H)))."""
    ks = jax.random.split(key, 6)
    s = 1.0 / np.sqrt(hidden)
    u = lambda k, shape: jax.random.uniform(k, shape, jnp.float32, -s, s)
    return {
        "w_ih": u(ks[0], (3, input_dim, hidden)),   # gate order r, z, n; pre-transposed
        "w_hh": u(ks[1], (3, hidden, hidden)),
        "b_ih": u(ks[2], (3, 1, hidden)),
        "b_hh": u(ks[3], (3, 1, hidden)),
        "w_e":  u(ks[4], (hidden, human_size)),     # emission Linear, pre-transposed
        "b_e":  u(ks[5], (1, human_size)),
    }


if __name__ == "__main__":
    # small shapes consistent with OpenLoopGRU(target_seq_len=8, rnn_decoder_size=32,
    # batch_size=2, output_dim=64, input_dim=4, residual_output=True, init_state_noise=False)
    B, T, D_IN, HIDDEN, HUMAN = 2, 8, 4, 32, 64

    key = jax.random.PRNGKey(0)
    k_par, k_in = jax.random.split(key)
    params = init_params(k_par, D_IN, HIDDEN, HUMAN)
    inputs = jax.random.normal(k_in, (B, T, D_IN), jnp.float32)

    y = open_loop_gru_forward(inputs, params)
    y = jax.block_until_ready(y)

    y_ref = jax.block_until_ready(ref_forward(inputs, params))
    np.testing.assert_allclose(np.asarray(y), np.asarray(y_ref), rtol=1e-5, atol=1e-5)

    # TODO(synk): dropout / init_state_noise=True (random initial state) paths are not
    # exercised; forward() with defaults uses a zero initial state, which is what the
    # kernel implements.  bf16 weight/scratch storage is a further (numerics-changing) option.
    print("KERNEL_OK")
</pallas_src>

<mosaic_0001>
module attributes {stable_mosaic.version = 11 : i64} {
  func.func @openloop_gru_kernel(%arg0: memref<64x4xf32, #tpu.memory_space<vmem>>, %arg1: memref<4x384xf32, #tpu.memory_space<vmem>>, %arg2: memref<128x384xf32, #tpu.memory_space<vmem>>, %arg3: memref<1x384xf32, #tpu.memory_space<vmem>>, %arg4: memref<1x128xf32, #tpu.memory_space<vmem>>, %arg5: memref<128x128xf32, #tpu.memory_space<vmem>>, %arg6: memref<1x128xf32, #tpu.memory_space<vmem>>, %arg7: memref<64x128xf32, #tpu.memory_space<vmem>>, %arg8: memref<64x384xf32, #tpu.memory_space<vmem>>, %arg9: memref<64x128xf32, #tpu.memory_space<vmem>>) attributes {dimension_semantics = [], scalar_prefetch = 0 : i64, scratch_operands = 2 : i64, tpu.core_type = #tpu.core_type<tc>} {
    %c0 = arith.constant 0 : index
    %c0_0 = arith.constant 0 : index
    %0 = vector.load %arg0[%c0, %c0_0] : memref<64x4xf32, #tpu.memory_space<vmem>>, vector<64x4xf32>
    %c0_1 = arith.constant 0 : index
    %c0_2 = arith.constant 0 : index
    %1 = vector.load %arg1[%c0_1, %c0_2] : memref<4x384xf32, #tpu.memory_space<vmem>>, vector<4x384xf32>
    %cst = arith.constant dense<0.000000e+00> : vector<64x384xf32>
    %2 = tpu.matmul %0, %1, %cst {dimension_numbers = #tpu.dot_dimension_numbers<[1], [0], [0], [1], [0, 0, 1, 1], [], []>} : vector<64x4xf32>, vector<4x384xf32>, vector<64x384xf32> -> vector<64x384xf32>
    %c0_3 = arith.constant 0 : index
    %c0_4 = arith.constant 0 : index
    %3 = vector.load %arg3[%c0_3, %c0_4] : memref<1x384xf32, #tpu.memory_space<vmem>>, vector<1x384xf32>
    %4 = vector.broadcast %3 : vector<1x384xf32> to vector<64x384xf32>
    %5 = arith.addf %2, %4 : vector<64x384xf32>
    %c0_5 = arith.constant 0 : index
    %c0_6 = arith.constant 0 : index
    %6 = vector.load %arg8[%c0_5, %c0_6] : memref<64x384xf32, #tpu.memory_space<vmem>>, vector<64x384xf32>
    tpu.vector_store %arg8[%c0_5, %c0_6], %5 {strides = array<i32>} : memref<64x384xf32, #tpu.memory_space<vmem>>, vector<64x384xf32>,
    %c0_7 = arith.constant 0 : index
    %c0_8 = arith.constant 0 : index
    %7 = vector.load %arg4[%c0_7, %c0_8] : memref<1x128xf32, #tpu.memory_space<vmem>>, vector<1x128xf32>
    %8 = vector.shape_cast %7 : vector<1x128xf32> to vector<1x128xf32>
    %9 = vector.broadcast %8 : vector<1x128xf32> to vector<8x128xf32>
    %cst_9 = arith.constant 0.000000e+00 : f32
    %10 = vector.broadcast %cst_9 : f32 to vector<8x128xf32>
    %c0_i32 = arith.constant 0 : i32
    %c64_i32 = arith.constant 64 : i32
    %11 = arith.muli %c0_i32, %c64_i32 : i32
    %12 = tpu.assume_multiple %11, 64 : i32
    %c0_i32_10 = arith.constant 0 : i32
    %c8_i32 = arith.constant 8 : i32
    %13 = arith.muli %c0_i32_10, %c8_i32 : i32
    %14 = arith.addi %12, %13 : i32
    %15 = tpu.assume_multiple %14, 8 : i32
    %16 = arith.index_cast %15 : i32 to index
    %c0_11 = arith.constant 0 : index
    %17 = vector.load %arg8[%16, %c0_11] : memref<64x384xf32, #tpu.memory_space<vmem>>, vector<8x384xf32>
    %c0_12 = arith.constant 0 : index
    %c0_13 = arith.constant 0 : index
    %18 = vector.load %arg2[%c0_12, %c0_13] : memref<128x384xf32, #tpu.memory_space<vmem>>, vector<128x384xf32>
    %cst_14 = arith.constant dense<0.000000e+00> : vector<8x384xf32>
    %19 = tpu.matmul %10, %18, %cst_14 {dimension_numbers = #tpu.dot_dimension_numbers<[1], [0], [0], [1], [0, 0, 1, 1], [], []>} : vector<8x128xf32>, vector<128x384xf32>, vector<8x384xf32> -> vector<8x384xf32>
    %20 = vector.extract_strided_slice %17 {offsets = [0, 0], sizes = [8, 256], strides = [1, 1]} : vector<8x384xf32> to vector<8x256xf32>
    %21 = vector.extract_strided_slice %19 {offsets = [0, 0], sizes = [8, 256], strides = [1, 1]} : vector<8x384xf32> to vector<8x256xf32>
    %22 = arith.addf %20, %21 : vector<8x256xf32>
    %23 = arith.negf %22 : vector<8x256xf32>
    %24 = math.exp %23 : vector<8x256xf32>
    %cst_15 = arith.constant 1.000000e+00 : f32
    %25 = vector.broadcast %cst_15 : f32 to vector<8x256xf32>
    %26 = arith.addf %25, %24 : vector<8x256xf32>
    %27 = arith.divf %25, %26 : vector<8x256xf32>
    %28 = vector.extract_strided_slice %27 {offsets = [0, 0], sizes = [8, 128], strides = [1, 1]} : vector<8x256xf32> to vector<8x128xf32>
    %29 = vector.extract_strided_slice %27 {offsets = [0, 128], sizes = [8, 128], strides = [1, 1]} : vector<8x256xf32> to vector<8x128xf32>
    %30 = vector.extract_strided_slice %17 {offsets = [0, 256], sizes = [8, 128], strides = [1, 1]} : vector<8x384xf32> to vector<8x128xf32>
    %31 = vector.extract_strided_slice %19 {offsets = [0, 256], sizes = [8, 128], strides = [1, 1]} : vector<8x384xf32> to vector<8x128xf32>
    %32 = arith.addf %31, %9 : vector<8x128xf32>
    %33 = arith.mulf %28, %32 : vector<8x128xf32>
    %34 = arith.addf %30, %33 : vector<8x128xf32>
    %35 = math.tanh %34 : vector<8x128xf32>
    %cst_16 = arith.constant 1.000000e+00 : f32
    %36 = vector.broadcast %cst_16 : f32 to vector<8x128xf32>
    %37 = arith.subf %36, %29 : vector<8x128xf32>
    %38 = arith.mulf %37, %35 : vector<8x128xf32>
    %39 = arith.mulf %29, %10 : vector<8x128xf32>
    %40 = arith.addf %38, %39 : vector<8x128xf32>
    %c8_i32_17 = arith.constant 8 : i32
    %41 = arith.muli %c0_i32_10, %c8_i32_17 : i32
    %42 = tpu.assume_multiple %41, 8 : i32
    %43 = arith.index_cast %42 : i32 to index
    %c0_18 = arith.constant 0 : index
    %44 = vector.load %arg9[%43, %c0_18] : memref<64x128xf32, #tpu.memory_space<vmem>>, vector<8x128xf32>
    tpu.vector_store %arg9[%43, %c0_18], %40 {strides = array<i32>} : memref<64x128xf32, #tpu.memory_space<vmem>>, vector<8x128xf32>,
    %c1_i32 = arith.constant 1 : i32
    %c8_i32_19 = arith.constant 8 : i32
    %45 = arith.muli %c1_i32, %c8_i32_19 : i32
    %46 = arith.addi %12, %45 : i32
    %47 = tpu.assume_multiple %46, 8 : i32
    %48 = arith.index_cast %47 : i32 to index
    %c0_20 = arith.constant 0 : index
    %49 = vector.load %arg8[%48, %c0_20] : memref<64x384xf32, #tpu.memory_space<vmem>>, vector<8x384xf32>
    %c0_21 = arith.constant 0 : index
    %c0_22 = arith.constant 0 : index
    %50 = vector.load %arg2[%c0_21, %c0_22] : memref<128x384xf32, #tpu.memory_space<vmem>>, vector<128x384xf32>
    %cst_23 = arith.constant dense<0.000000e+00> : vector<8x384xf32>
    %51 = tpu.matmul %40, %50, %cst_23 {dimension_numbers = #tpu.dot_dimension_numbers<[1], [0], [0], [1], [0, 0, 1, 1], [], []>} : vector<8x128xf32>, vector<128x384xf32>, vector<8x384xf32> -> vector<8x384xf32>
    %52 = vector.extract_strided_slice %49 {offsets = [0, 0], sizes = [8, 256], strides = [1, 1]} : vector<8x384xf32> to vector<8x256xf32>
    %53 = vector.extract_strided_slice %51 {offsets = [0, 0], sizes = [8, 256], strides = [1, 1]} : vector<8x384xf32> to vector<8x256xf32>
    %54 = arith.addf %52, %53 : vector<8x256xf32>
    %55 = arith.negf %54 : vector<8x256xf32>
    %56 = math.exp %55 : vector<8x256xf32>
    %cst_24 = arith.constant 1.000000e+00 : f32
    %57 = vector.broadcast %cst_24 : f32 to vector<8x256xf32>
    %58 = arith.addf %57, %56 : vector<8x256xf32>
    %59 = arith.divf %57, %58 : vector<8x256xf32>
    %60 = vector.extract_strided_slice %59 {offsets = [0, 0], sizes = [8, 128], strides = [1, 1]} : vector<8x256xf32> to vector<8x128xf32>
    %61 = vector.extract_strided_slice %59 {offsets = [0, 128], sizes = [8, 128], strides = [1, 1]} : vector<8x256xf32> to vector<8x128xf32>
    %62 = vector.extract_strided_slice %49 {offsets = [0, 256], sizes = [8, 128], strides = [1, 1]} : vector<8x384xf32> to vector<8x128xf32>
    %63 = vector.extract_strided_slice %51 {offsets = [0, 256], sizes = [8, 128], strides = [1, 1]} : vector<8x384xf32> to vector<8x128xf32>
    %64 = arith.addf %63, %9 : vector<8x128xf32>
    %65 = arith.mulf %60, %64 : vector<8x128xf32>
    %66 = arith.addf %62, %65 : vector<8x128xf32>
    %67 = math.tanh %66 : vector<8x128xf32>
    %cst_25 = arith.constant 1.000000e+00 : f32
    %68 = vector.broadcast %cst_25 : f32 to vector<8x128xf32>
    %69 = arith.subf %68, %61 : vector<8x128xf32>
    %70 = arith.mulf %69, %67 : vector<8x128xf32>
    %71 = arith.mulf %61, %40 : vector<8x128xf32>
    %72 = arith.addf %70, %71 : vector<8x128xf32>
    %c8_i32_26 = arith.constant 8 : i32
    %73 = arith.muli %c1_i32, %c8_i32_26 : i32
    %74 = tpu.assume_multiple %73, 8 : i32
    %75 = arith.index_cast %74 : i32 to index
    %c0_27 = arith.constant 0 : index
    %76 = vector.load %arg9[%75, %c0_27] : memref<64x128xf32, #tpu.memory_space<vmem>>, vector<8x128xf32>
    tpu.vector_store %arg9[%75, %c0_27], %72 {strides = array<i32>} : memref<64x128xf32, #tpu.memory_space<vmem>>, vector<8x128xf32>,
    %c2_i32 = arith.constant 2 : i32
    %c8_i32_28 = arith.constant 8 : i32
    %77 = arith.muli %c2_i32, %c8_i32_28 : i32
    %78 = arith.addi %12, %77 : i32
    %79 = tpu.assume_multiple %78, 8 : i32
    %80 = arith.index_cast %79 : i32 to index
    %c0_29 = arith.constant 0 : index
    %81 = vector.load %arg8[%80, %c0_29] : memref<64x384xf32, #tpu.memory_space<vmem>>, vector<8x384xf32>
    %c0_30 = arith.constant 0 : index
    %c0_31 = arith.constant 0 : index
    %82 = vector.load %arg2[%c0_30, %c0_31] : memref<128x384xf32, #tpu.memory_space<vmem>>, vector<128x384xf32>
    %cst_32 = arith.constant dense<0.000000e+00> : vector<8x384xf32>
    %83 = tpu.matmul %72, %82, %cst_32 {dimension_numbers = #tpu.dot_dimension_numbers<[1], [0], [0], [1], [0, 0, 1, 1], [], []>} : vector<8x128xf32>, vector<128x384xf32>, vector<8x384xf32> -> vector<8x384xf32>
    %84 = vector.extract_strided_slice %81 {offsets = [0, 0], sizes = [8, 256], strides = [1, 1]} : vector<8x384xf32> to vector<8x256xf32>
    %85 = vector.extract_strided_slice %83 {offsets = [0, 0], sizes = [8, 256], strides = [1, 1]} : vector<8x384xf32> to vector<8x256xf32>
    %86 = arith.addf %84, %85 : vector<8x256xf32>
    %87 = arith.negf %86 : vector<8x256xf32>
    %88 = math.exp %87 : vector<8x256xf32>
    %cst_33 = arith.constant 1.000000e+00 : f32
    %89 = vector.broadcast %cst_33 : f32 to vector<8x256xf32>
    %90 = arith.addf %89, %88 : vector<8x256xf32>
    %91 = arith.divf %89, %90 : vector<8x256xf32>
    %92 = vector.extract_strided_slice %91 {offsets = [0, 0], sizes = [8, 128], strides = [1, 1]} : vector<8x256xf32> to vector<8x128xf32>
    %93 = vector.extract_strided_slice %91 {offsets = [0, 128], sizes = [8, 128], strides = [1, 1]} : vector<8x256xf32> to vector<8x128xf32>
    %94 = vector.extract_strided_slice %81 {offsets = [0, 256], sizes = [8, 128], strides = [1, 1]} : vector<8x384xf32> to vector<8x128xf32>
    %95 = vector.extract_strided_slice %83 {offsets = [0, 256], sizes = [8, 128], strides = [1, 1]} : vector<8x384xf32> to vector<8x128xf32>
    %96 = arith.addf %95, %9 : vector<8x128xf32>
    %97 = arith.mulf %92, %96 : vector<8x128xf32>
    %98 = arith.addf %94, %97 : vector<8x128xf32>
    %99 = math.tanh %98 : vector<8x128xf32>
    %cst_34 = arith.constant 1.000000e+00 : f32
    %100 = vector.broadcast %cst_34 : f32 to vector<8x128xf32>
    %101 = arith.subf %100, %93 : vector<8x128xf32>
    %102 = arith.mulf %101, %99 : vector<8x128xf32>
    %103 = arith.mulf %93, %72 : vector<8x128xf32>
    %104 = arith.addf %102, %103 : vector<8x128xf32>
    %c8_i32_35 = arith.constant 8 : i32
    %105 = arith.muli %c2_i32, %c8_i32_35 : i32
    %106 = tpu.assume_multiple %105, 8 : i32
    %107 = arith.index_cast %106 : i32 to index
    %c0_36 = arith.constant 0 : index
    %108 = vector.load %arg9[%107, %c0_36] : memref<64x128xf32, #tpu.memory_space<vmem>>, vector<8x128xf32>
    tpu.vector_store %arg9[%107, %c0_36], %104 {strides = array<i32>} : memref<64x128xf32, #tpu.memory_space<vmem>>, vector<8x128xf32>,
    %c3_i32 = arith.constant 3 : i32
    %c8_i32_37 = arith.constant 8 : i32
    %109 = arith.muli %c3_i32, %c8_i32_37 : i32
    %110 = arith.addi %12, %109 : i32
    %111 = tpu.assume_multiple %110, 8 : i32
    %112 = arith.index_cast %111 : i32 to index
    %c0_38 = arith.constant 0 : index
    %113 = vector.load %arg8[%112, %c0_38] : memref<64x384xf32, #tpu.memory_space<vmem>>, vector<8x384xf32>
    %c0_39 = arith.constant 0 : index
    %c0_40 = arith.constant 0 : index
    %114 = vector.load %arg2[%c0_39, %c0_40] : memref<128x384xf32, #tpu.memory_space<vmem>>, vector<128x384xf32>
    %cst_41 = arith.constant dense<0.000000e+00> : vector<8x384xf32>
    %115 = tpu.matmul %104, %114, %cst_41 {dimension_numbers = #tpu.dot_dimension_numbers<[1], [0], [0], [1], [0, 0, 1, 1], [], []>} : vector<8x128xf32>, vector<128x384xf32>, vector<8x384xf32> -> vector<8x384xf32>
    %116 = vector.extract_strided_slice %113 {offsets = [0, 0], sizes = [8, 256], strides = [1, 1]} : vector<8x384xf32> to vector<8x256xf32>
    %117 = vector.extract_strided_slice %115 {offsets = [0, 0], sizes = [8, 256], strides = [1, 1]} : vector<8x384xf32> to vector<8x256xf32>
    %118 = arith.addf %116, %117 : vector<8x256xf32>
    %119 = arith.negf %118 : vector<8x256xf32>
    %120 = math.exp %119 : vector<8x256xf32>
    %cst_42 = arith.constant 1.000000e+00 : f32
    %121 = vector.broadcast %cst_42 : f32 to vector<8x256xf32>
    %122 = arith.addf %121, %120 : vector<8x256xf32>
    %123 = arith.divf %121, %122 : vector<8x256xf32>
    %124 = vector.extract_strided_slice %123 {offsets = [0, 0], sizes = [8, 128], strides = [1, 1]} : vector<8x256xf32> to vector<8x128xf32>
    %125 = vector.extract_strided_slice %123 {offsets = [0, 128], sizes = [8, 128], strides = [1, 1]} : vector<8x256xf32> to vector<8x128xf32>
    %126 = vector.extract_strided_slice %113 {offsets = [0, 256], sizes = [8, 128], strides = [1, 1]} : vector<8x384xf32> to vector<8x128xf32>
    %127 = vector.extract_strided_slice %115 {offsets = [0, 256], sizes = [8, 128], strides = [1, 1]} : vector<8x384xf32> to vector<8x128xf32>
    %128 = arith.addf %127, %9 : vector<8x128xf32>
    %129 = arith.mulf %124, %128 : vector<8x128xf32>
    %130 = arith.addf %126, %129 : vector<8x128xf32>
    %131 = math.tanh %130 : vector<8x128xf32>
    %cst_43 = arith.constant 1.000000e+00 : f32
    %132 = vector.broadcast %cst_43 : f32 to vector<8x128xf32>
    %133 = arith.subf %132, %125 : vector<8x128xf32>
    %134 = arith.mulf %133, %131 : vector<8x128xf32>
    %135 = arith.mulf %125, %104 : vector<8x128xf32>
    %136 = arith.addf %134, %135 : vector<8x128xf32>
    %c8_i32_44 = arith.constant 8 : i32
    %137 = arith.muli %c3_i32, %c8_i32_44 : i32
    %138 = tpu.assume_multiple %137, 8 : i32
    %139 = arith.index_cast %138 : i32 to index
    %c0_45 = arith.constant 0 : index
    %140 = vector.load %arg9[%139, %c0_45] : memref<64x128xf32, #tpu.memory_space<vmem>>, vector<8x128xf32>
    tpu.vector_store %arg9[%139, %c0_45], %136 {strides = array<i32>} : memref<64x128xf32, #tpu.memory_space<vmem>>, vector<8x128xf32>,
    %c4_i32 = arith.constant 4 : i32
    %c8_i32_46 = arith.constant 8 : i32
    %141 = arith.muli %c4_i32, %c8_i32_46 : i32
    %142 = arith.addi %12, %141 : i32
    %143 = tpu.assume_multiple %142, 8 : i32
    %144 = arith.index_cast %143 : i32 to index
    %c0_47 = arith.constant 0 : index
    %145 = vector.load %arg8[%144, %c0_47] : memref<64x384xf32, #tpu.memory_space<vmem>>, vector<8x384xf32>
    %c0_48 = arith.constant 0 : index
    %c0_49 = arith.constant 0 : index
    %146 = vector.load %arg2[%c0_48, %c0_49] : memref<128x384xf32, #tpu.memory_space<vmem>>, vector<128x384xf32>
    %cst_50 = arith.constant dense<0.000000e+00> : vector<8x384xf32>
    %147 = tpu.matmul %136, %146, %cst_50 {dimension_numbers = #tpu.dot_dimension_numbers<[1], [0], [0], [1], [0, 0, 1, 1], [], []>} : vector<8x128xf32>, vector<128x384xf32>, vector<8x384xf32> -> vector<8x384xf32>
    %148 = vector.extract_strided_slice %145 {offsets = [0, 0], sizes = [8, 256], strides = [1, 1]} : vector<8x384xf32> to vector<8x256xf32>
    %149 = vector.extract_strided_slice %147 {offsets = [0, 0], sizes = [8, 256], strides = [1, 1]} : vector<8x384xf32> to vector<8x256xf32>
    %150 = arith.addf %148, %149 : vector<8x256xf32>
    %151 = arith.negf %150 : vector<8x256xf32>
    %152 = math.exp %151 : vector<8x256xf32>
    %cst_51 = arith.constant 1.000000e+00 : f32
    %153 = vector.broadcast %cst_51 : f32 to vector<8x256xf32>
    %154 = arith.addf %153, %152 : vector<8x256xf32>
    %155 = arith.divf %153, %154 : vector<8x256xf32>
    %156 = vector.extract_strided_slice %155 {offsets = [0, 0], sizes = [8, 128], strides = [1, 1]} : vector<8x256xf32> to vector<8x128xf32>
    %157 = vector.extract_strided_slice %155 {offsets = [0, 128], sizes = [8, 128], strides = [1, 1]} : vector<8x256xf32> to vector<8x128xf32>
    %158 = vector.extract_strided_slice %145 {offsets = [0, 256], sizes = [8, 128], strides = [1, 1]} : vector<8x384xf32> to vector<8x128xf32>
    %159 = vector.extract_strided_slice %147 {offsets = [0, 256], sizes = [8, 128], strides = [1, 1]} : vector<8x384xf32> to vector<8x128xf32>
    %160 = arith.addf %159, %9 : vector<8x128xf32>
    %161 = arith.mulf %156, %160 : vector<8x128xf32>
    %162 = arith.addf %158, %161 : vector<8x128xf32>
    %163 = math.tanh %162 : vector<8x128xf32>
    %cst_52 = arith.constant 1.000000e+00 : f32
    %164 = vector.broadcast %cst_52 : f32 to vector<8x128xf32>
    %165 = arith.subf %164, %157 : vector<8x128xf32>
    %166 = arith.mulf %165, %163 : vector<8x128xf32>
    %167 = arith.mulf %157, %136 : vector<8x128xf32>
    %168 = arith.addf %166, %167 : vector<8x128xf32>
    %c8_i32_53 = arith.constant 8 : i32
    %169 = arith.muli %c4_i32, %c8_i32_53 : i32
    %170 = tpu.assume_multiple %169, 8 : i32
    %171 = arith.index_cast %170 : i32 to index
    %c0_54 = arith.constant 0 : index
    %172 = vector.load %arg9[%171, %c0_54] : memref<64x128xf32, #tpu.memory_space<vmem>>, vector<8x128xf32>
    tpu.vector_store %arg9[%171, %c0_54], %168 {strides = array<i32>} : memref<64x128xf32, #tpu.memory_space<vmem>>, vector<8x128xf32>,
    %c5_i32 = arith.constant 5 : i32
    %c8_i32_55 = arith.constant 8 : i32
    %173 = arith.muli %c5_i32, %c8_i32_55 : i32
    %174 = arith.addi %12, %173 : i32
    %175 = tpu.assume_multiple %174, 8 : i32
    %176 = arith.index_cast %175 : i32 to index
    %c0_56 = arith.constant 0 : index
    %177 = vector.load %arg8[%176, %c0_56] : memref<64x384xf32, #tpu.memory_space<vmem>>, vector<8x384xf32>
    %c0_57 = arith.constant 0 : index
    %c0_58 = arith.constant 0 : index
    %178 = vector.load %arg2[%c0_57, %c0_58] : memref<128x384xf32, #tpu.memory_space<vmem>>, vector<128x384xf32>
    %cst_59 = arith.constant dense<0.000000e+00> : vector<8x384xf32>
    %179 = tpu.matmul %168, %178, %cst_59 {dimension_numbers = #tpu.dot_dimension_numbers<[1], [0], [0], [1], [0, 0, 1, 1], [], []>} : vector<8x128xf32>, vector<128x384xf32>, vector<8x384xf32> -> vector<8x384xf32>
    %180 = vector.extract_strided_slice %177 {offsets = [0, 0], sizes = [8, 256], strides = [1, 1]} : vector<8x384xf32> to vector<8x256xf32>
    %181 = vector.extract_strided_slice %179 {offsets = [0, 0], sizes = [8, 256], strides = [1, 1]} : vector<8x384xf32> to vector<8x256xf32>
    %182 = arith.addf %180, %181 : vector<8x256xf32>
    %183 = arith.negf %182 : vector<8x256xf32>
    %184 = math.exp %183 : vector<8x256xf32>
    %cst_60 = arith.constant 1.000000e+00 : f32
    %185 = vector.broadcast %cst_60 : f32 to vector<8x256xf32>
    %186 = arith.addf %185, %184 : vector<8x256xf32>
    %187 = arith.divf %185, %186 : vector<8x256xf32>
    %188 = vector.extract_strided_slice %187 {offsets = [0, 0], sizes = [8, 128], strides = [1, 1]} : vector<8x256xf32> to vector<8x128xf32>
    %189 = vector.extract_strided_slice %187 {offsets = [0, 128], sizes = [8, 128], strides = [1, 1]} : vector<8x256xf32> to vector<8x128xf32>
    %190 = vector.extract_strided_slice %177 {offsets = [0, 256], sizes = [8, 128], strides = [1, 1]} : vector<8x384xf32> to vector<8x128xf32>
    %191 = vector.extract_strided_slice %179 {offsets = [0, 256], sizes = [8, 128], strides = [1, 1]} : vector<8x384xf32> to vector<8x128xf32>
    %192 = arith.addf %191, %9 : vector<8x128xf32>
    %193 = arith.mulf %188, %192 : vector<8x128xf32>
    %194 = arith.addf %190, %193 : vector<8x128xf32>
    %195 = math.tanh %194 : vector<8x128xf32>
    %cst_61 = arith.constant 1.000000e+00 : f32
    %196 = vector.broadcast %cst_61 : f32 to vector<8x128xf32>
    %197 = arith.subf %196, %189 : vector<8x128xf32>
    %198 = arith.mulf %197, %195 : vector<8x128xf32>
    %199 = arith.mulf %189, %168 : vector<8x128xf32>
    %200 = arith.addf %198, %199 : vector<8x128xf32>
    %c8_i32_62 = arith.constant 8 : i32
    %201 = arith.muli %c5_i32, %c8_i32_62 : i32
    %202 = tpu.assume_multiple %201, 8 : i32
    %203 = arith.index_cast %202 : i32 to index
    %c0_63 = arith.constant 0 : index
    %204 = vector.load %arg9[%203, %c0_63] : memref<64x128xf32, #tpu.memory_space<vmem>>, vector<8x128xf32>
    tpu.vector_store %arg9[%203, %c0_63], %200 {strides = array<i32>} : memref<64x128xf32, #tpu.memory_space<vmem>>, vector<8x128xf32>,
    %c6_i32 = arith.constant 6 : i32
    %c8_i32_64 = arith.constant 8 : i32
    %205 = arith.muli %c6_i32, %c8_i32_64 : i32
    %206 = arith.addi %12, %205 : i32
    %207 = tpu.assume_multiple %206, 8 : i32
    %208 = arith.index_cast %207 : i32 to index
    %c0_65 = arith.constant 0 : index
    %209 = vector.load %arg8[%208, %c0_65] : memref<64x384xf32, #tpu.memory_space<vmem>>, vector<8x384xf32>
    %c0_66 = arith.constant 0 : index
    %c0_67 = arith.constant 0 : index
    %210 = vector.load %arg2[%c0_66, %c0_67] : memref<128x384xf32, #tpu.memory_space<vmem>>, vector<128x384xf32>
    %cst_68 = arith.constant dense<0.000000e+00> : vector<8x384xf32>
    %211 = tpu.matmul %200, %210, %cst_68 {dimension_numbers = #tpu.dot_dimension_numbers<[1], [0], [0], [1], [0, 0, 1, 1], [], []>} : vector<8x128xf32>, vector<128x384xf32>, vector<8x384xf32> -> vector<8x384xf32>
    %212 = vector.extract_strided_slice %209 {offsets = [0, 0], sizes = [8, 256], strides = [1, 1]} : vector<8x384xf32> to vector<8x256xf32>
    %213 = vector.extract_strided_slice %211 {offsets = [0, 0], sizes = [8, 256], strides = [1, 1]} : vector<8x384xf32> to vector<8x256xf32>
    %214 = arith.addf %212, %213 : vector<8x256xf32>
    %215 = arith.negf %214 : vector<8x256xf32>
    %216 = math.exp %215 : vector<8x256xf32>
    %cst_69 = arith.constant 1.000000e+00 : f32
    %217 = vector.broadcast %cst_69 : f32 to vector<8x256xf32>
    %218 = arith.addf %217, %216 : vector<8x256xf32>
    %219 = arith.divf %217, %218 : vector<8x256xf32>
    %220 = vector.extract_strided_slice %219 {offsets = [0, 0], sizes = [8, 128], strides = [1, 1]} : vector<8x256xf32> to vector<8x128xf32>
    %221 = vector.extract_strided_slice %219 {offsets = [0, 128], sizes = [8, 128], strides = [1, 1]} : vector<8x256xf32> to vector<8x128xf32>
    %222 = vector.extract_strided_slice %209 {offsets = [0, 256], sizes = [8, 128], strides = [1, 1]} : vector<8x384xf32> to vector<8x128xf32>
    %223 = vector.extract_strided_slice %211 {offsets = [0, 256], sizes = [8, 128], strides = [1, 1]} : vector<8x384xf32> to vector<8x128xf32>
    %224 = arith.addf %223, %9 : vector<8x128xf32>
    %225 = arith.mulf %220, %224 : vector<8x128xf32>
    %226 = arith.addf %222, %225 : vector<8x128xf32>
    %227 = math.tanh %226 : vector<8x128xf32>
    %cst_70 = arith.constant 1.000000e+00 : f32
    %228 = vector.broadcast %cst_70 : f32 to vector<8x128xf32>
    %229 = arith.subf %228, %221 : vector<8x128xf32>
    %230 = arith.mulf %229, %227 : vector<8x128xf32>
    %231 = arith.mulf %221, %200 : vector<8x128xf32>
    %232 = arith.addf %230, %231 : vector<8x128xf32>
    %c8_i32_71 = arith.constant 8 : i32
    %233 = arith.muli %c6_i32, %c8_i32_71 : i32
    %234 = tpu.assume_multiple %233, 8 : i32
    %235 = arith.index_cast %234 : i32 to index
    %c0_72 = arith.constant 0 : index
    %236 = vector.load %arg9[%235, %c0_72] : memref<64x128xf32, #tpu.memory_space<vmem>>, vector<8x128xf32>
    tpu.vector_store %arg9[%235, %c0_72], %232 {strides = array<i32>} : memref<64x128xf32, #tpu.memory_space<vmem>>, vector<8x128xf32>,
    %c7_i32 = arith.constant 7 : i32
    %c8_i32_73 = arith.constant 8 : i32
    %237 = arith.muli %c7_i32, %c8_i32_73 : i32
    %238 = arith.addi %12, %237 : i32
    %239 = tpu.assume_multiple %238, 8 : i32
    %240 = arith.index_cast %239 : i32 to index
    %c0_74 = arith.constant 0 : index
    %241 = vector.load %arg8[%240, %c0_74] : memref<64x384xf32, #tpu.memory_space<vmem>>, vector<8x384xf32>
    %c0_75 = arith.constant 0 : index
    %c0_76 = arith.constant 0 : index
    %242 = vector.load %arg2[%c0_75, %c0_76] : memref<128x384xf32, #tpu.memory_space<vmem>>, vector<128x384xf32>
    %cst_77 = arith.constant dense<0.000000e+00> : vector<8x384xf32>
    %243 = tpu.matmul %232, %242, %cst_77 {dimension_numbers = #tpu.dot_dimension_numbers<[1], [0], [0], [1], [0, 0, 1, 1], [], []>} : vector<8x128xf32>, vector<128x384xf32>, vector<8x384xf32> -> vector<8x384xf32>
    %244 = vector.extract_strided_slice %241 {offsets = [0, 0], sizes = [8, 256], strides = [1, 1]} : vector<8x384xf32> to vector<8x256xf32>
    %245 = vector.extract_strided_slice %243 {offsets = [0, 0], sizes = [8, 256], strides = [1, 1]} : vector<8x384xf32> to vector<8x256xf32>
    %246 = arith.addf %244, %245 : vector<8x256xf32>
    %247 = arith.negf %246 : vector<8x256xf32>
    %248 = math.exp %247 : vector<8x256xf32>
    %cst_78 = arith.constant 1.000000e+00 : f32
    %249 = vector.broadcast %cst_78 : f32 to vector<8x256xf32>
    %250 = arith.addf %249, %248 : vector<8x256xf32>
    %251 = arith.divf %249, %250 : vector<8x256xf32>
    %252 = vector.extract_strided_slice %251 {offsets = [0, 0], sizes = [8, 128], strides = [1, 1]} : vector<8x256xf32> to vector<8x128xf32>
    %253 = vector.extract_strided_slice %251 {offsets = [0, 128], sizes = [8, 128], strides = [1, 1]} : vector<8x256xf32> to vector<8x128xf32>
    %254 = vector.extract_strided_slice %241 {offsets = [0, 256], sizes = [8, 128], strides = [1, 1]} : vector<8x384xf32> to vector<8x128xf32>
    %255 = vector.extract_strided_slice %243 {offsets = [0, 256], sizes = [8, 128], strides = [1, 1]} : vector<8x384xf32> to vector<8x128xf32>
    %256 = arith.addf %255, %9 : vector<8x128xf32>
    %257 = arith.mulf %252, %256 : vector<8x128xf32>
    %258 = arith.addf %254, %257 : vector<8x128xf32>
    %259 = math.tanh %258 : vector<8x128xf32>
    %cst_79 = arith.constant 1.000000e+00 : f32
    %260 = vector.broadcast %cst_79 : f32 to vector<8x128xf32>
    %261 = arith.subf %260, %253 : vector<8x128xf32>
    %262 = arith.mulf %261, %259 : vector<8x128xf32>
    %263 = arith.mulf %253, %232 : vector<8x128xf32>
    %264 = arith.addf %262, %263 : vector<8x128xf32>
    %c8_i32_80 = arith.constant 8 : i32
    %265 = arith.muli %c7_i32, %c8_i32_80 : i32
    %266 = tpu.assume_multiple %265, 8 : i32
    %267 = arith.index_cast %266 : i32 to index
    %c0_81 = arith.constant 0 : index
    %268 = vector.load %arg9[%267, %c0_81] : memref<64x128xf32, #tpu.memory_space<vmem>>, vector<8x128xf32>
    tpu.vector_store %arg9[%267, %c0_81], %264 {strides = array<i32>} : memref<64x128xf32, #tpu.memory_space<vmem>>, vector<8x128xf32>,
    %c8_i32_82 = arith.constant 8 : i32
    %c0_83 = arith.constant 0 : index
    %c0_84 = arith.constant 0 : index
    %269 = vector.load %arg9[%c0_83, %c0_84] : memref<64x128xf32, #tpu.memory_space<vmem>>, vector<64x128xf32>
    %c0_85 = arith.constant 0 : index
    %c0_86 = arith.constant 0 : index
    %270 = vector.load %arg5[%c0_85, %c0_86] : memref<128x128xf32, #tpu.memory_space<vmem>>, vector<128x128xf32>
    %cst_87 = arith.constant dense<0.000000e+00> : vector<64x128xf32>
    %271 = tpu.matmul %269, %270, %cst_87 {dimension_numbers = #tpu.dot_dimension_numbers<[1], [0], [0], [1], [0, 0, 1, 1], [], []>} : vector<64x128xf32>, vector<128x128xf32>, vector<64x128xf32> -> vector<64x128xf32>
    %c0_88 = arith.constant 0 : index
    %c0_89 = arith.constant 0 : index
    %272 = vector.load %arg6[%c0_88, %c0_89] : memref<1x128xf32, #tpu.memory_space<vmem>>, vector<1x128xf32>
    %273 = vector.broadcast %272 : vector<1x128xf32> to vector<64x128xf32>
    %274 = arith.addf %271, %273 : vector<64x128xf32>
    %275 = arith.index_cast %12 : i32 to index
    %c0_90 = arith.constant 0 : index
    %276 = vector.load %arg7[%275, %c0_90] : memref<64x128xf32, #tpu.memory_space<vmem>>, vector<64x128xf32>
    tpu.vector_store %arg7[%275, %c0_90], %274 {strides = array<i32>} : memref<64x128xf32, #tpu.memory_space<vmem>>, vector<64x128xf32>,
    %c1_i32_91 = arith.constant 1 : i32
    return
  }
}

</mosaic_0001>

<llo_original>
// kernel: tpu_custom_call.1
$region0: #{tpu_custom_call.1}
  #allocation0 [shape = 'u32[]', space=smem, size = 0x4, offset = 0x4, fixed_abs, tag = 'smem constant byte address 0x4 - core index']
  #allocation1 [shape = 'u32[144,128]{1,0:T(1,128)}', space=vmem, size = 0x12000, scoped, tag = 'internal scratch']
  #allocation2 [shape = 'f32[64,384]{1,0:T(8,128)}', space=vmem, size = 0x18000, scoped, tag = 'scratch operand']
  #allocation3 [shape = 'f32[64,128]{1,0:T(8,128)}', space=vmem, size = 0x8000, scoped, tag = 'scratch operand']
  %s0 = inlined_call_operand.vmem [shape: f32[64,4], index: 0, kind: input, shape index: {}]
  %s1 = inlined_call_operand.vmem [shape: f32[4,384], index: 1, kind: input, shape index: {}]
  %s2 = inlined_call_operand.hbm [shape: f32[128,384], index: 2, kind: input, shape index: {}]
  %s3 = inlined_call_operand.vmem [shape: f32[1,384], index: 3, kind: input, shape index: {}]
  %s4 = inlined_call_operand.vmem [shape: f32[1,128], index: 4, kind: input, shape index: {}]
  %s5 = inlined_call_operand.hbm [shape: f32[128,128], index: 5, kind: input, shape index: {}]
  %s6 = inlined_call_operand.vmem [shape: f32[1,128], index: 6, kind: input, shape index: {}]
  %s7 = inlined_call_operand.hbm [shape: f32[64,128], index: 7, kind: output, shape index: {}]
  %s8 = sld [smem:[#allocation0]]
  $region46: #{tpu_custom_call.1} parent=0
    _
  %s10 = ssub.s32 1, %s8
  %s11 = scalar_select 0, %s10, %s8
  $region1: #{tpu_custom_call.1} parent=0
    #allocation4 [shape = 'u8[196608]{0}', space=vmem, size = 0x30000, scoped, tag = 'input window, operand 2, single buffered']
    #allocation5 [shape = 's32[1]{0}', space=sflag, size = 0x4, scoped, tag = 'scoped memory for tpu_custom_call.1']
    #allocation6 [shape = 's32[1]{0}', space=sflag, size = 0x4, scoped, tag = 'scoped memory for tpu_custom_call.1']
    #allocation7 [shape = 'u8[65536]{0}', space=vmem, size = 0x10000, scoped, tag = 'input window, operand 5, single buffered']
    #allocation8 [shape = 's32[1]{0}', space=sflag, size = 0x4, scoped, tag = 'scoped memory for tpu_custom_call.1']
    #allocation9 [shape = 'u8[32768]{0}', space=vmem, size = 0x8000, scoped, tag = 'output window, operand 0, single buffered']
    %12 = vsyncpa [#allocation5], 0
    %13 = vsyncpa [#allocation8], 0
    %14 = vsyncpa [#allocation6], 0
    // Predicated region
    $region2: #{tpu_custom_call.1} parent=1 // pred_check
      _
    $region3: #{tpu_custom_call.1} parent=1 // pred_check_branch
      %16 = sbr.rel (0) target = $region5
    $region4: #{tpu_custom_call.1} parent=1 // pred_region
      _
    $region5: #{tpu_custom_call.1} parent=1 // pred_fallthru
      _
    // Predicated region
    $region6: #{tpu_custom_call.1} parent=1 // pred_check
      _
    $region7: #{tpu_custom_call.1} parent=1 // pred_check_branch
      %18 = sbr.rel (0) target = $region9
    $region8: #{tpu_custom_call.1} parent=1 // pred_region
      _
    $region9: #{tpu_custom_call.1} parent=1 // pred_fallthru
      _
    // Predicated region
    $region10: #{tpu_custom_call.1} parent=1 // pred_check
      _
    $region11: #{tpu_custom_call.1} parent=1 // pred_check_branch
      %20 = sbr.rel (0) target = $region13
    $region12: #{tpu_custom_call.1} parent=1 // pred_region
      %s22 = ssub.s32 6144, 6144
      %23 = vsyncadd [#allocation5], %s22
      %s24 = sshll.u32 [#allocation4], 4
      %s25 = int_to_ptr.vmem [resolvable:$true] %s24
      %30 = dma.hbm_to_vmem [thread:$0]  %s2, 6144, %s25, [#allocation5], 384, 384, 24
    $region13: #{tpu_custom_call.1} parent=1 // pred_fallthru
      _
    // Predicated region
    $region14: #{tpu_custom_call.1} parent=1 // pred_check
      _
    $region15: #{tpu_custom_call.1} parent=1 // pred_check_branch
      %32 = sbr.rel (0) target = $region17
    $region16: #{tpu_custom_call.1} parent=1 // pred_region
      _
    $region17: #{tpu_custom_call.1} parent=1 // pred_fallthru
      _
    // Predicated region
    $region18: #{tpu_custom_call.1} parent=1 // pred_check
      _
    $region19: #{tpu_custom_call.1} parent=1 // pred_check_branch
      %34 = sbr.rel (0) target = $region21
    $region20: #{tpu_custom_call.1} parent=1 // pred_region
      _
    $region21: #{tpu_custom_call.1} parent=1 // pred_fallthru
      _
    // Predicated region
    $region22: #{tpu_custom_call.1} parent=1 // pred_check
      _
    $region23: #{tpu_custom_call.1} parent=1 // pred_check_branch
      %36 = sbr.rel (0) target = $region25
    $region24: #{tpu_custom_call.1} parent=1 // pred_region
      %s38 = ssub.s32 2048, 2048
      %39 = vsyncadd [#allocation8], %s38
      %s40 = sshll.u32 [#allocation7], 4
      %s41 = int_to_ptr.vmem [resolvable:$true] %s40
      %46 = dma.hbm_to_vmem [thread:$0]  %s5, 2048, %s41, [#allocation8], 128, 128, 8
    $region25: #{tpu_custom_call.1} parent=1 // pred_fallthru
      _
    // Predicated region
    $region26: #{tpu_custom_call.1} parent=1 // pred_check
      _
    $region27: #{tpu_custom_call.1} parent=1 // pred_check_branch
      %48 = sbr.rel (0) target = $region29
    $region28: #{tpu_custom_call.1} parent=1 // pred_region
      _
    $region29: #{tpu_custom_call.1} parent=1 // pred_fallthru
      _
    // Predicated region
    $region30: #{tpu_custom_call.1} parent=1 // pred_check
      _
    $region31: #{tpu_custom_call.1} parent=1 // pred_check_branch
      %50 = sbr.rel (0) target = $region33
    $region32: #{tpu_custom_call.1} parent=1 // pred_region
      %51 = dma.done [#allocation5], 6144
    $region33: #{tpu_custom_call.1} parent=1 // pred_fallthru
      _
    // Predicated region
    $region34: #{tpu_custom_call.1} parent=1 // pred_check
      _
    $region35: #{tpu_custom_call.1} parent=1 // pred_check_branch
      %53 = sbr.rel (0) target = $region37
    $region36: #{tpu_custom_call.1} parent=1 // pred_region
      %54 = dma.done [#allocation8], 2048
    $region37: #{tpu_custom_call.1} parent=1 // pred_fallthru
      _
    %v55 = vld [vmem:[%s0] sm:$0xff]
    %v56 = vld [vmem:[%s0 + $0x8] sm:$0xff]
    %v57 = vld [vmem:[%s0 + $0x10] sm:$0xff]
    %v58 = vld [vmem:[%s0 + $0x18] sm:$0xff]
    %v59 = vld [vmem:[%s0 + $0x20] sm:$0xff]
    %v60 = vld [vmem:[%s0 + $0x28] sm:$0xff]
    %v61 = vld [vmem:[%s0 + $0x30] sm:$0xff]
    %v62 = vld [vmem:[%s0 + $0x38] sm:$0xff]
    %v63 = vld [vmem:[%s1] sm:$0xff]
    %v64 = vld [vmem:[%s1 + $0x8] sm:$0xf]
    %v65 = vld [vmem:[%s3] sm:$0x7]
    %v67 = vlaneseq
    %v68 = vshrl.u32 %v67, 7
    %v69 = vsub.s32 0, %v68
    %v70 = vrot.slane %v65, %v69
    %v71 = vlaneseq
    %v72 = vshrl.u32 %v71, 7
    %v73 = vsub.s32 1, %v72
    %v74 = vrot.slane %v65, %v73
    %v75 = vlaneseq
    %v76 = vshrl.u32 %v75, 7
    %v77 = vsub.s32 2, %v76
    %v78 = vrot.slane %v65, %v77
    %v84 = vcombine.high %v63, %v63
    %vm85 = vcmask 31744
    %v87 = vsel %vm85, %v55, 0
    %v90 = vsel %vm85, %v56, 0
    %v93 = vsel %vm85, %v57, 0
    %v96 = vsel %vm85, %v58, 0
    %v99 = vsel %vm85, %v59, 0
    %v102 = vsel %vm85, %v60, 0
    %v105 = vsel %vm85, %v61, 0
    %v108 = vsel %vm85, %v62, 0
    %vm110 = vcmask 1043456
    %v111 = vsel %vm110, %v63, 0
    %v113 = vsel %vm110, %v84, 0
    %v115 = vsel %vm110, %v64, 0
    %117 = vmatprep.subr.mxu0 0.0
    %118 = vmatpush1.msra.mxu0 0.0
    %119 = vmatprep.subr.mxu0 0.0
    %120 = vmatpush1.msra.mxu0 0.0
    %121 = vmatprep.subr.mxu0 0.0
    %122 = vmatpush1.msra.mxu0 0.0
    %123 = vmatprep.subr.mxu0 0.0
    %124 = vmatpush1.msra.mxu0 0.0
    %125 = vmatprep.subr.mxu0 0.0
    %126 = vmatpush1.msra.mxu0 0.0
    %127 = vmatprep.subr.mxu0 0.0
    %128 = vmatpush1.msra.mxu0 0.0
    %129 = vmatprep.subr.mxu0 0.0
    %130 = vmatpush1.msra.mxu0 0.0
    %131 = vmatprep.subr.mxu0 0.0
    %132 = vmatpush1.msra.mxu0 0.0
    %133 = vmatprep.subr.mxu0 0.0
    %134 = vmatpush1.msra.mxu0 0.0
    %135 = vmatprep.subr.mxu0 0.0
    %136 = vmatpush1.msra.mxu0 0.0
    %137 = vmatprep.subr.mxu0 0.0
    %138 = vmatpush1.msra.mxu0 0.0
    %139 = vmatprep.subr.mxu0 0.0
    %140 = vmatpush1.msra.mxu0 0.0
    %141 = vmatprep.subr.mxu0 0.0
    %142 = vmatpush1.msra.mxu0 0.0
    %143 = vmatprep.subr.mxu0 0.0
    %144 = vmatpush1.msra.mxu0 0.0
    %145 = vmatprep.subr.mxu0 0.0
    %146 = vmatpush1.msra.mxu0 0.0
    %147 = vmatprep.subr.mxu0 %v113
    %148 = vmatpush1.msra.mxu0 %v111
    %149 = vmatprep.subr.mxu0 0.0
    %150 = vmatpush2.msra.mxu0 0.0
    %151 = vmatprep.subr.mxu0 0.0
    %152 = vmatpush2.msra.mxu0 0.0
    %153 = vmatprep.subr.mxu0 0.0
    %154 = vmatpush2.msra.mxu0 0.0
    %155 = vmatprep.subr.mxu0 0.0
    %156 = vmatpush2.msra.mxu0 0.0
    %157 = vmatprep.subr.mxu0 0.0
    %158 = vmatpush2.msra.mxu0 0.0
    %159 = vmatprep.subr.mxu0 0.0
    %160 = vmatpush2.msra.mxu0 0.0
    %161 = vmatprep.subr.mxu0 0.0
    %162 = vmatpush2.msra.mxu0 0.0
    %163 = vmatprep.subr.mxu0 0.0
    %164 = vmatpush2.msra.mxu0 0.0
    %165 = vmatprep.subr.mxu0 0.0
    %166 = vmatpush2.msra.mxu0 0.0
    %167 = vmatprep.subr.mxu0 0.0
    %168 = vmatpush2.msra.mxu0 0.0
    %169 = vmatprep.subr.mxu0 0.0
    %170 = vmatpush2.msra.mxu0 0.0
    %171 = vmatprep.subr.mxu0 0.0
    %172 = vmatpush2.msra.mxu0 0.0
    %173 = vmatprep.subr.mxu0 0.0
    %174 = vmatpush2.msra.mxu0 0.0
    %175 = vmatprep.subr.mxu0 0.0
    %176 = vmatpush2.msra.mxu0 0.0
    %177 = vmatprep.subr.mxu0 0.0
    %178 = vmatpush2.msra.mxu0 0.0
    %179 = vmatprep.subr.mxu0 0.0
    %180 = vmatpush2.msra.mxu0 0.0
    %181 = vmatprep.mubr.f32.mxu0 0.0
    %182 = vmatmul.mubr.f32.gmra.mxu0 %v87
    %v183 = vpop.f32.mrf.mxu0
    %v184 = vadd.f32 %v70, %v183
    %v185 = vpop.f32.mrf.mxu0
    %v186 = vadd.f32 %v74, %v185
    %187 = vmatprep.mubr.f32.mxu0 0.0
    %188 = vmatmul.mubr.f32.gmra.mxu0 %v90
    %v189 = vpop.f32.mrf.mxu0
    %v190 = vadd.f32 %v70, %v189
    %v191 = vpop.f32.mrf.mxu0
    %v192 = vadd.f32 %v74, %v191
    %193 = vmatprep.mubr.f32.mxu0 0.0
    %194 = vmatmul.mubr.f32.gmra.mxu0 %v93
    %v195 = vpop.f32.mrf.mxu0
    %v196 = vadd.f32 %v70, %v195
    %v197 = vpop.f32.mrf.mxu0
    %v198 = vadd.f32 %v74, %v197
    %199 = vmatprep.mubr.f32.mxu0 0.0
    %200 = vmatmul.mubr.f32.gmra.mxu0 %v96
    %v201 = vpop.f32.mrf.mxu0
    %v202 = vadd.f32 %v70, %v201
    %v203 = vpop.f32.mrf.mxu0
    %v204 = vadd.f32 %v74, %v203
    %205 = vmatprep.mubr.f32.mxu0 0.0
    %206 = vmatmul.mubr.f32.gmra.mxu0 %v99
    %v207 = vpop.f32.mrf.mxu0
    %v208 = vadd.f32 %v70, %v207
    %v209 = vpop.f32.mrf.mxu0
    %v210 = vadd.f32 %v74, %v209
    %211 = vmatprep.mubr.f32.mxu0 0.0
    %212 = vmatmul.mubr.f32.gmra.mxu0 %v102
    %v213 = vpop.f32.mrf.mxu0
    %v214 = vadd.f32 %v70, %v213
    %v215 = vpop.f32.mrf.mxu0
    %v216 = vadd.f32 %v74, %v215
    %217 = vmatprep.mubr.f32.mxu0 0.0
    %218 = vmatmul.mubr.f32.gmra.mxu0 %v105
    %v219 = vpop.f32.mrf.mxu0
    %v220 = vadd.f32 %v70, %v219
    %v221 = vpop.f32.mrf.mxu0
    %v222 = vadd.f32 %v74, %v221
    %223 = vmatprep.mubr.f32.mxu0 0.0
    %224 = vmatmul.mubr.f32.gmra.mxu0 %v108
    %v225 = vpop.f32.mrf.mxu0
    %v226 = vadd.f32 %v70, %v225
    %v227 = vpop.f32.mrf.mxu0
    %v228 = vadd.f32 %v74, %v227
    %229 = vdwg.mxu0
    %230 = vmatprep.subr.mxu0 0.0
    %231 = vmatpush1.msra.mxu0 0.0
    %232 = vmatprep.subr.mxu0 0.0
    %233 = vmatpush1.msra.mxu0 0.0
    %234 = vmatprep.subr.mxu0 0.0
    %235 = vmatpush1.msra.mxu0 0.0
    %236 = vmatprep.subr.mxu0 0.0
    %237 = vmatpush1.msra.mxu0 0.0
    %238 = vmatprep.subr.mxu0 0.0
    %239 = vmatpush1.msra.mxu0 0.0
    %240 = vmatprep.subr.mxu0 0.0
    %241 = vmatpush1.msra.mxu0 0.0
    %242 = vmatprep.subr.mxu0 0.0
    %243 = vmatpush1.msra.mxu0 0.0
    %244 = vmatprep.subr.mxu0 0.0
    %245 = vmatpush1.msra.mxu0 0.0
    %246 = vmatprep.subr.mxu0 0.0
    %247 = vmatpush1.msra.mxu0 0.0
    %248 = vmatprep.subr.mxu0 0.0
    %249 = vmatpush1.msra.mxu0 0.0
    %250 = vmatprep.subr.mxu0 0.0
    %251 = vmatpush1.msra.mxu0 0.0
    %252 = vmatprep.subr.mxu0 0.0
    %253 = vmatpush1.msra.mxu0 0.0
    %254 = vmatprep.subr.mxu0 0.0
    %255 = vmatpush1.msra.mxu0 0.0
    %256 = vmatprep.subr.mxu0 0.0
    %257 = vmatpush1.msra.mxu0 0.0
    %258 = vmatprep.subr.mxu0 0.0
    %259 = vmatpush1.msra.mxu0 0.0
    %260 = vmatprep.subr.mxu0 0.0
    %261 = vmatpush1.msra.mxu0 %v115
    %262 = vmatprep.subr.mxu0 0.0
    %263 = vmatpush2.msra.mxu0 0.0
    %264 = vmatprep.subr.mxu0 0.0
    %265 = vmatpush2.msra.mxu0 0.0
    %266 = vmatprep.subr.mxu0 0.0
    %267 = vmatpush2.msra.mxu0 0.0
    %268 = vmatprep.subr.mxu0 0.0
    %269 = vmatpush2.msra.mxu0 0.0
    %270 = vmatprep.subr.mxu0 0.0
    %271 = vmatpush2.msra.mxu0 0.0
    %272 = vmatprep.subr.mxu0 0.0
    %273 = vmatpush2.msra.mxu0 0.0
    %274 = vmatprep.subr.mxu0 0.0
    %275 = vmatpush2.msra.mxu0 0.0
    %276 = vmatprep.subr.mxu0 0.0
    %277 = vmatpush2.msra.mxu0 0.0
    %278 = vmatprep.subr.mxu0 0.0
    %279 = vmatpush2.msra.mxu0 0.0
    %280 = vmatprep.subr.mxu0 0.0
    %281 = vmatpush2.msra.mxu0 0.0
    %282 = vmatprep.subr.mxu0 0.0
    %283 = vmatpush2.msra.mxu0 0.0
    %284 = vmatprep.subr.mxu0 0.0
    %285 = vmatpush2.msra.mxu0 0.0
    %286 = vmatprep.subr.mxu0 0.0
    %287 = vmatpush2.msra.mxu0 0.0
    %288 = vmatprep.subr.mxu0 0.0
    %289 = vmatpush2.msra.mxu0 0.0
    %290 = vmatprep.subr.mxu0 0.0
    %291 = vmatpush2.msra.mxu0 0.0
    %292 = vmatprep.subr.mxu0 0.0
    %293 = vmatpush2.msra.mxu0 0.0
    %294 = vmatprep.mubr.f32.mxu0 0.0
    %295 = vmatmul.mubr.f32.gmra.mxu0 %v87
    %v296 = vpop.f32.mrf.mxu0
    %v297 = vadd.f32 %v78, %v296
    %v298 = vpop.f32.mrf.mxu0
    %299 = vmatprep.mubr.f32.mxu0 0.0
    %300 = vmatmul.mubr.f32.gmra.mxu0 %v90
    %v301 = vpop.f32.mrf.mxu0
    %v302 = vadd.f32 %v78, %v301
    %v303 = vpop.f32.mrf.mxu0
    %304 = vmatprep.mubr.f32.mxu0 0.0
    %305 = vmatmul.mubr.f32.gmra.mxu0 %v93
    %v306 = vpop.f32.mrf.mxu0
    %v307 = vadd.f32 %v78, %v306
    %v308 = vpop.f32.mrf.mxu0
    %309 = vmatprep.mubr.f32.mxu0 0.0
    %310 = vmatmul.mubr.f32.gmra.mxu0 %v96
    %v311 = vpop.f32.mrf.mxu0
    %v312 = vadd.f32 %v78, %v311
    %v313 = vpop.f32.mrf.mxu0
    %314 = vmatprep.mubr.f32.mxu0 0.0
    %315 = vmatmul.mubr.f32.gmra.mxu0 %v99
    %v316 = vpop.f32.mrf.mxu0
    %v317 = vadd.f32 %v78, %v316
    %v318 = vpop.f32.mrf.mxu0
    %319 = vmatprep.mubr.f32.mxu0 0.0
    %320 = vmatmul.mubr.f32.gmra.mxu0 %v102
    %v321 = vpop.f32.mrf.mxu0
    %v322 = vadd.f32 %v78, %v321
    %v323 = vpop.f32.mrf.mxu0
    %324 = vmatprep.mubr.f32.mxu0 0.0
    %325 = vmatmul.mubr.f32.gmra.mxu0 %v105
    %v326 = vpop.f32.mrf.mxu0
    %v327 = vadd.f32 %v78, %v326
    %v328 = vpop.f32.mrf.mxu0
    %329 = vmatprep.mubr.f32.mxu0 0.0
    %330 = vmatmul.mubr.f32.gmra.mxu0 %v108
    %v331 = vpop.f32.mrf.mxu0
    %v332 = vadd.f32 %v78, %v331
    %v333 = vpop.f32.mrf.mxu0
    %334 = vdwg.mxu0
    %335 = vst [vmem:[#allocation2] sm:$0xff] %v184
    %336 = vst [vmem:[#allocation2 + $0x8] sm:$0xff] %v186
    %337 = vst [vmem:[#allocation2 + $0x10] sm:$0xff] %v297
    %338 = vst [vmem:[#allocation2 + $0x18] sm:$0xff] %v190
    %339 = vst [vmem:[#allocation2 + $0x20] sm:$0xff] %v192
    %340 = vst [vmem:[#allocation2 + $0x28] sm:$0xff] %v302
    %341 = vst [vmem:[#allocation2 + $0x30] sm:$0xff] %v196
    %342 = vst [vmem:[#allocation2 + $0x38] sm:$0xff] %v198
    %343 = vst [vmem:[#allocation2 + $0x40] sm:$0xff] %v307
    %344 = vst [vmem:[#allocation2 + $0x48] sm:$0xff] %v202
    %345 = vst [vmem:[#allocation2 + $0x50] sm:$0xff] %v204
    %346 = vst [vmem:[#allocation2 + $0x58] sm:$0xff] %v312
    %347 = vst [vmem:[#allocation2 + $0x60] sm:$0xff] %v208
    %348 = vst [vmem:[#allocation2 + $0x68] sm:$0xff] %v210
    %349 = vst [vmem:[#allocation2 + $0x70] sm:$0xff] %v317
    %350 = vst [vmem:[#allocation2 + $0x78] sm:$0xff] %v214
    %351 = vst [vmem:[#allocation2 + $0x80] sm:$0xff] %v216
    %352 = vst [vmem:[#allocation2 + $0x88] sm:$0xff] %v322
    %353 = vst [vmem:[#allocation2 + $0x90] sm:$0xff] %v220
    %354 = vst [vmem:[#allocation2 + $0x98] sm:$0xff] %v222
    %355 = vst [vmem:[#allocation2 + $0xa0] sm:$0xff] %v327
    %356 = vst [vmem:[#allocation2 + $0xa8] sm:$0xff] %v226
    %357 = vst [vmem:[#allocation2 + $0xb0] sm:$0xff] %v228
    %358 = vst [vmem:[#allocation2 + $0xb8] sm:$0xff] %v332
    %v359 = vld [vmem:[%s4] sm:$0x1]
    %v361 = vlaneseq
    %v362 = vshrl.u32 %v361, 7
    %v363 = vsub.s32 0, %v362
    %v364 = vrot.slane %v359, %v363
    %s366 = smul.u32 0, 3
    %s367 = smul.addr %s366, 8
    %s368 = scalar_lea.vmem [#allocation2], %s367
    %v369 = vld [vmem:[%s368] sm:$0xff]
    %v370 = vld [vmem:[%s368 + $0x8] sm:$0xff]
    %v371 = vld [vmem:[%s368 + $0x10] sm:$0xff]
    %v372 = vld [vmem:[#allocation4] sm:$0xff]
    %v373 = vld [vmem:[#allocation4 + $0x8] sm:$0xff]
    %v374 = vld [vmem:[#allocation4 + $0x10] sm:$0xff]
    %v375 = vld [vmem:[#allocation4 + $0x18] sm:$0xff]
    %v376 = vld [vmem:[#allocation4 + $0x20] sm:$0xff]
    %v377 = vld [vmem:[#allocation4 + $0x28] sm:$0xff]
    %v378 = vld [vmem:[#allocation4 + $0x30] sm:$0xff]
    %v379 = vld [vmem:[#allocation4 + $0x38] sm:$0xff]
    %v380 = vld [vmem:[#allocation4 + $0x40] sm:$0xff]
    %v381 = vld [vmem:[#allocation4 + $0x48] sm:$0xff]
    %v382 = vld [vmem:[#allocation4 + $0x50] sm:$0xff]
    %v383 = vld [vmem:[#allocation4 + $0x58] sm:$0xff]
    %v384 = vld [vmem:[#allocation4 + $0x60] sm:$0xff]
    %v385 = vld [vmem:[#allocation4 + $0x68] sm:$0xff]
    %v386 = vld [vmem:[#allocation4 + $0x70] sm:$0xff]
    %v387 = vld [vmem:[#allocation4 + $0x78] sm:$0xff]
    %v388 = vld [vmem:[#allocation4 + $0x80] sm:$0xff]
    %v389 = vld [vmem:[#allocation4 + $0x88] sm:$0xff]
    %v390 = vld [vmem:[#allocation4 + $0x90] sm:$0xff]
    %v391 = vld [vmem:[#allocation4 + $0x98] sm:$0xff]
    %v392 = vld [vmem:[#allocation4 + $0xa0] sm:$0xff]
    %v393 = vld [vmem:[#allocation4 + $0xa8] sm:$0xff]
    %v394 = vld [vmem:[#allocation4 + $0xb0] sm:$0xff]
    %v395 = vld [vmem:[#allocation4 + $0xb8] sm:$0xff]
    %v396 = vld [vmem:[#allocation4 + $0xc0] sm:$0xff]
    %v397 = vld [vmem:[#allocation4 + $0xc8] sm:$0xff]
    %v398 = vld [vmem:[#allocation4 + $0xd0] sm:$0xff]
    %v399 = vld [vmem:[#allocation4 + $0xd8] sm:$0xff]
    %v400 = vld [vmem:[#allocation4 + $0xe0] sm:$0xff]
    %v401 = vld [vmem:[#allocation4 + $0xe8] sm:$0xff]
    %v402 = vld [vmem:[#allocation4 + $0xf0] sm:$0xff]
    %v403 = vld [vmem:[#allocation4 + $0xf8] sm:$0xff]
    %v404 = vld [vmem:[#allocation4 + $0x100] sm:$0xff]
    %v405 = vld [vmem:[#allocation4 + $0x108] sm:$0xff]
    %v406 = vld [vmem:[#allocation4 + $0x110] sm:$0xff]
    %v407 = vld [vmem:[#allocation4 + $0x118] sm:$0xff]
    %v408 = vld [vmem:[#allocation4 + $0x120] sm:$0xff]
    %v409 = vld [vmem:[#allocation4 + $0x128] sm:$0xff]
    %v410 = vld [vmem:[#allocation4 + $0x130] sm:$0xff]
    %v411 = vld [vmem:[#allocation4 + $0x138] sm:$0xff]
    %v412 = vld [vmem:[#allocation4 + $0x140] sm:$0xff]
    %v413 = vld [vmem:[#allocation4 + $0x148] sm:$0xff]
    %v414 = vld [vmem:[#allocation4 + $0x150] sm:$0xff]
    %v415 = vld [vmem:[#allocation4 + $0x158] sm:$0xff]
    %v416 = vld [vmem:[#allocation4 + $0x160] sm:$0xff]
    %v417 = vld [vmem:[#allocation4 + $0x168] sm:$0xff]
    %v418 = vld [vmem:[#allocation4 + $0x170] sm:$0xff]
    %v419 = vld [vmem:[#allocation4 + $0x178] sm:$0xff]
    %420 = vmatprep.subr.mxu0 %v418
    %421 = vmatpush1.msra.mxu0 %v417
    %422 = vmatprep.subr.mxu0 %v415
    %423 = vmatpush1.msra.mxu0 %v414
    %424 = vmatprep.subr.mxu0 %v412
    %425 = vmatpush1.msra.mxu0 %v411
    %426 = vmatprep.subr.mxu0 %v409
    %427 = vmatpush1.msra.mxu0 %v408
    %428 = vmatprep.subr.mxu0 %v406
    %429 = vmatpush1.msra.mxu0 %v405
    %430 = vmatprep.subr.mxu0 %v403
    %431 = vmatpush1.msra.mxu0 %v402
    %432 = vmatprep.subr.mxu0 %v400
    %433 = vmatpush1.msra.mxu0 %v399
    %434 = vmatprep.subr.mxu0 %v397
    %435 = vmatpush1.msra.mxu0 %v396
    %436 = vmatprep.subr.mxu0 %v394
    %437 = vmatpush1.msra.mxu0 %v393
    %438 = vmatprep.subr.mxu0 %v391
    %439 = vmatpush1.msra.mxu0 %v390
    %440 = vmatprep.subr.mxu0 %v388
    %441 = vmatpush1.msra.mxu0 %v387
    %442 = vmatprep.subr.mxu0 %v385
    %443 = vmatpush1.msra.mxu0 %v384
    %444 = vmatprep.subr.mxu0 %v382
    %445 = vmatpush1.msra.mxu0 %v381
    %446 = vmatprep.subr.mxu0 %v379
    %447 = vmatpush1.msra.mxu0 %v378
    %448 = vmatprep.subr.mxu0 %v376
    %449 = vmatpush1.msra.mxu0 %v375
    %450 = vmatprep.subr.mxu0 %v373
    %451 = vmatpush1.msra.mxu0 %v372
    %452 = vmatprep.subr.mxu0 0.0
    %453 = vmatpush2.msra.mxu0 0.0
    %454 = vmatprep.subr.mxu0 0.0
    %455 = vmatpush2.msra.mxu0 0.0
    %456 = vmatprep.subr.mxu0 0.0
    %457 = vmatpush2.msra.mxu0 0.0
    %458 = vmatprep.subr.mxu0 0.0
    %459 = vmatpush2.msra.mxu0 0.0
    %460 = vmatprep.subr.mxu0 0.0
    %461 = vmatpush2.msra.mxu0 0.0
    %462 = vmatprep.subr.mxu0 0.0
    %463 = vmatpush2.msra.mxu0 0.0
    %464 = vmatprep.subr.mxu0 0.0
    %465 = vmatpush2.msra.mxu0 0.0
    %466 = vmatprep.subr.mxu0 0.0
    %467 = vmatpush2.msra.mxu0 0.0
    %468 = vmatprep.subr.mxu0 0.0
    %469 = vmatpush2.msra.mxu0 0.0
    %470 = vmatprep.subr.mxu0 0.0
    %471 = vmatpush2.msra.mxu0 0.0
    %472 = vmatprep.subr.mxu0 0.0
    %473 = vmatpush2.msra.mxu0 0.0
    %474 = vmatprep.subr.mxu0 0.0
    %475 = vmatpush2.msra.mxu0 0.0
    %476 = vmatprep.subr.mxu0 0.0
    %477 = vmatpush2.msra.mxu0 0.0
    %478 = vmatprep.subr.mxu0 0.0
    %479 = vmatpush2.msra.mxu0 0.0
    %480 = vmatprep.subr.mxu0 0.0
    %481 = vmatpush2.msra.mxu0 0.0
    %482 = vmatprep.subr.mxu0 0.0
    %483 = vmatpush2.msra.mxu0 0.0
    %484 = vmatprep.mubr.f32.mxu0 0.0
    %485 = vmatmul.mubr.f32.gmra.mxu0 0.0
    %v486 = vpop.f32.mrf.mxu0
    %v487 = vadd.f32 0.0, %v486
    %v488 = vpop.f32.mrf.mxu0
    %v489 = vadd.f32 0.0, %v488
    %490 = vdwg.mxu0
    %491 = vmatprep.subr.mxu0 0.0
    %492 = vmatpush1.msra.mxu0 %v419
    %493 = vmatprep.subr.mxu0 0.0
    %494 = vmatpush1.msra.mxu0 %v416
    %495 = vmatprep.subr.mxu0 0.0
    %496 = vmatpush1.msra.mxu0 %v413
    %497 = vmatprep.subr.mxu0 0.0
    %498 = vmatpush1.msra.mxu0 %v410
    %499 = vmatprep.subr.mxu0 0.0
    %500 = vmatpush1.msra.mxu0 %v407
    %501 = vmatprep.subr.mxu0 0.0
    %502 = vmatpush1.msra.mxu0 %v404
    %503 = vmatprep.subr.mxu0 0.0
    %504 = vmatpush1.msra.mxu0 %v401
    %505 = vmatprep.subr.mxu0 0.0
    %506 = vmatpush1.msra.mxu0 %v398
    %507 = vmatprep.subr.mxu0 0.0
    %508 = vmatpush1.msra.mxu0 %v395
    %509 = vmatprep.subr.mxu0 0.0
    %510 = vmatpush1.msra.mxu0 %v392
    %511 = vmatprep.subr.mxu0 0.0
    %512 = vmatpush1.msra.mxu0 %v389
    %513 = vmatprep.subr.mxu0 0.0
    %514 = vmatpush1.msra.mxu0 %v386
    %515 = vmatprep.subr.mxu0 0.0
    %516 = vmatpush1.msra.mxu0 %v383
    %517 = vmatprep.subr.mxu0 0.0
    %518 = vmatpush1.msra.mxu0 %v380
    %519 = vmatprep.subr.mxu0 0.0
    %520 = vmatpush1.msra.mxu0 %v377
    %521 = vmatprep.subr.mxu0 0.0
    %522 = vmatpush1.msra.mxu0 %v374
    %523 = vmatprep.subr.mxu0 0.0
    %524 = vmatpush2.msra.mxu0 0.0
    %525 = vmatprep.subr.mxu0 0.0
    %526 = vmatpush2.msra.mxu0 0.0
    %527 = vmatprep.subr.mxu0 0.0
    %528 = vmatpush2.msra.mxu0 0.0
    %529 = vmatprep.subr.mxu0 0.0
    %530 = vmatpush2.msra.mxu0 0.0
    %531 = vmatprep.subr.mxu0 0.0
    %532 = vmatpush2.msra.mxu0 0.0
    %533 = vmatprep.subr.mxu0 0.0
    %534 = vmatpush2.msra.mxu0 0.0
    %535 = vmatprep.subr.mxu0 0.0
    %536 = vmatpush2.msra.mxu0 0.0
    %537 = vmatprep.subr.mxu0 0.0
    %538 = vmatpush2.msra.mxu0 0.0
    %539 = vmatprep.subr.mxu0 0.0
    %540 = vmatpush2.msra.mxu0 0.0
    %541 = vmatprep.subr.mxu0 0.0
    %542 = vmatpush2.msra.mxu0 0.0
    %543 = vmatprep.subr.mxu0 0.0
    %544 = vmatpush2.msra.mxu0 0.0
    %545 = vmatprep.subr.mxu0 0.0
    %546 = vmatpush2.msra.mxu0 0.0
    %547 = vmatprep.subr.mxu0 0.0
    %548 = vmatpush2.msra.mxu0 0.0
    %549 = vmatprep.subr.mxu0 0.0
    %550 = vmatpush2.msra.mxu0 0.0
    %551 = vmatprep.subr.mxu0 0.0
    %552 = vmatpush2.msra.mxu0 0.0
    %553 = vmatprep.subr.mxu0 0.0
    %554 = vmatpush2.msra.mxu0 0.0
    %555 = vmatprep.mubr.f32.mxu0 0.0
    %556 = vmatmul.mubr.f32.gmra.mxu0 0.0
    %v557 = vpop.f32.mrf.mxu0
    %v558 = vadd.f32 0.0, %v557
    %v559 = vpop.f32.mrf.mxu0
    %560 = vdwg.mxu0
    %v561 = vadd.f32 %v369, %v487
    %v562 = vadd.f32 %v370, %v489
    %v563 = vxor.u32 %v561, 2147483648
    %v564 = vxor.u32 %v562, 2147483648
    %v565 = vmul.f32 %v563, 1.442695
    %v566 = vpow.pop %v565
    %v567 = vmul.f32 %v564, 1.442695
    %v568 = vpow.pop %v567
    %v569 = vadd.f32 %v566, 1.0
    %v570 = vadd.f32 %v568, 1.0
    %v571 = vrcp.pop %v569
    %v572 = vmul.f32 1.0, %v571
    %v573 = vrcp.pop %v570
    %v574 = vmul.f32 1.0, %v573
    %v575 = vadd.f32 %v558, %v364
    %v576 = vmul.f32 %v572, %v575
    %v577 = vadd.f32 %v371, %v576
    %v578 = vtanh.pop %v577
    %v579 = vsub.f32 1.0, %v574
    %v580 = vmul.f32 %v579, %v578
    %v581 = vmul.f32 %v574, 0.0
    %v582 = vadd.f32 %v580, %v581
    %583 = vst [vmem:[#allocation3] sm:$0xff] %v582
    %s584 = sadd.s32 0, 8
    %s585 = sshra.s32 %s584, 3
    %s586 = sand.u32 %s584, 7
    %s587 = smul.u32 %s585, 3
    %s588 = smul.addr %s587, 8
    %s589 = scalar_lea.vmem [#allocation2], %s588
    %v590 = vld [vmem:[%s589] sm:$0xff]
    %v591 = vld [vmem:[%s589 + $0x8] sm:$0xff]
    %v592 = vld [vmem:[%s589 + $0x10] sm:$0xff]
    %v593 = vld [vmem:[#allocation4] sm:$0xff]
    %v594 = vld [vmem:[#allocation4 + $0x8] sm:$0xff]
    %v595 = vld [vmem:[#allocation4 + $0x10] sm:$0xff]
    %v596 = vld [vmem:[#allocation4 + $0x18] sm:$0xff]
    %v597 = vld [vmem:[#allocation4 + $0x20] sm:$0xff]
    %v598 = vld [vmem:[#allocation4 + $0x28] sm:$0xff]
    %v599 = vld [vmem:[#allocation4 + $0x30] sm:$0xff]
    %v600 = vld [vmem:[#allocation4 + $0x38] sm:$0xff]
    %v601 = vld [vmem:[#allocation4 + $0x40] sm:$0xff]
    %v602 = vld [vmem:[#allocation4 + $0x48] sm:$0xff]
    %v603 = vld [vmem:[#allocation4 + $0x50] sm:$0xff]
    %v604 = vld [vmem:[#allocation4 + $0x58] sm:$0xff]
    %v605 = vld [vmem:[#allocation4 + $0x60] sm:$0xff]
    %v606 = vld [vmem:[#allocation4 + $0x68] sm:$0xff]
    %v607 = vld [vmem:[#allocation4 + $0x70] sm:$0xff]
    %v608 = vld [vmem:[#allocation4 + $0x78] sm:$0xff]
    %v609 = vld [vmem:[#allocation4 + $0x80] sm:$0xff]
    %v610 = vld [vmem:[#allocation4 + $0x88] sm:$0xff]
    %v611 = vld [vmem:[#allocation4 + $0x90] sm:$0xff]
    %v612 = vld [vmem:[#allocation4 + $0x98] sm:$0xff]
    %v613 = vld [vmem:[#allocation4 + $0xa0] sm:$0xff]
    %v614 = vld [vmem:[#allocation4 + $0xa8] sm:$0xff]
    %v615 = vld [vmem:[#allocation4 + $0xb0] sm:$0xff]
    %v616 = vld [vmem:[#allocation4 + $0xb8] sm:$0xff]
    %v617 = vld [vmem:[#allocation4 + $0xc0] sm:$0xff]
    %v618 = vld [vmem:[#allocation4 + $0xc8] sm:$0xff]
    %v619 = vld [vmem:[#allocation4 + $0xd0] sm:$0xff]
    %v620 = vld [vmem:[#allocation4 + $0xd8] sm:$0xff]
    %v621 = vld [vmem:[#allocation4 + $0xe0] sm:$0xff]
    %v622 = vld [vmem:[#allocation4 + $0xe8] sm:$0xff]
    %v623 = vld [vmem:[#allocation4 + $0xf0] sm:$0xff]
    %v624 = vld [vmem:[#allocation4 + $0xf8] sm:$0xff]
    %v625 = vld [vmem:[#allocation4 + $0x100] sm:$0xff]
    %v626 = vld [vmem:[#allocation4 + $0x108] sm:$0xff]
    %v627 = vld [vmem:[#allocation4 + $0x110] sm:$0xff]
    %v628 = vld [vmem:[#allocation4 + $0x118] sm:$0xff]
    %v629 = vld [vmem:[#allocation4 + $0x120] sm:$0xff]
    %v630 = vld [vmem:[#allocation4 + $0x128] sm:$0xff]
    %v631 = vld [vmem:[#allocation4 + $0x130] sm:$0xff]
    %v632 = vld [vmem:[#allocation4 + $0x138] sm:$0xff]
    %v633 = vld [vmem:[#allocation4 + $0x140] sm:$0xff]
    %v634 = vld [vmem:[#allocation4 + $0x148] sm:$0xff]
    %v635 = vld [vmem:[#allocation4 + $0x150] sm:$0xff]
    %v636 = vld [vmem:[#allocation4 + $0x158] sm:$0xff]
    %v637 = vld [vmem:[#allocation4 + $0x160] sm:$0xff]
    %v638 = vld [vmem:[#allocation4 + $0x168] sm:$0xff]
    %v639 = vld [vmem:[#allocation4 + $0x170] sm:$0xff]
    %v640 = vld [vmem:[#allocation4 + $0x178] sm:$0xff]
    %641 = vmatprep.subr.mxu0 %v639
    %642 = vmatpush1.msra.mxu0 %v638
    %643 = vmatprep.subr.mxu0 %v636
    %644 = vmatpush1.msra.mxu0 %v635
    %645 = vmatprep.subr.mxu0 %v633
    %646 = vmatpush1.msra.mxu0 %v632
    %647 = vmatprep.subr.mxu0 %v630
    %648 = vmatpush1.msra.mxu0 %v629
    %649 = vmatprep.subr.mxu0 %v627
    %650 = vmatpush1.msra.mxu0 %v626
    %651 = vmatprep.subr.mxu0 %v624
    %652 = vmatpush1.msra.mxu0 %v623
    %653 = vmatprep.subr.mxu0 %v621
    %654 = vmatpush1.msra.mxu0 %v620
    %655 = vmatprep.subr.mxu0 %v618
    %656 = vmatpush1.msra.mxu0 %v617
    %657 = vmatprep.subr.mxu0 %v615
    %658 = vmatpush1.msra.mxu0 %v614
    %659 = vmatprep.subr.mxu0 %v612
    %660 = vmatpush1.msra.mxu0 %v611
    %661 = vmatprep.subr.mxu0 %v609
    %662 = vmatpush1.msra.mxu0 %v608
    %663 = vmatprep.subr.mxu0 %v606
    %664 = vmatpush1.msra.mxu0 %v605
    %665 = vmatprep.subr.mxu0 %v603
    %666 = vmatpush1.msra.mxu0 %v602
    %667 = vmatprep.subr.mxu0 %v600
    %668 = vmatpush1.msra.mxu0 %v599
    %669 = vmatprep.subr.mxu0 %v597
    %670 = vmatpush1.msra.mxu0 %v596
    %671 = vmatprep.subr.mxu0 %v594
    %672 = vmatpush1.msra.mxu0 %v593
    %673 = vmatprep.subr.mxu0 0.0
    %674 = vmatpush2.msra.mxu0 0.0
    %675 = vmatprep.subr.mxu0 0.0
    %676 = vmatpush2.msra.mxu0 0.0
    %677 = vmatprep.subr.mxu0 0.0
    %678 = vmatpush2.msra.mxu0 0.0
    %679 = vmatprep.subr.mxu0 0.0
    %680 = vmatpush2.msra.mxu0 0.0
    %681 = vmatprep.subr.mxu0 0.0
    %682 = vmatpush2.msra.mxu0 0.0
    %683 = vmatprep.subr.mxu0 0.0
    %684 = vmatpush2.msra.mxu0 0.0
    %685 = vmatprep.subr.mxu0 0.0
    %686 = vmatpush2.msra.mxu0 0.0
    %687 = vmatprep.subr.mxu0 0.0
    %688 = vmatpush2.msra.mxu0 0.0
    %689 = vmatprep.subr.mxu0 0.0
    %690 = vmatpush2.msra.mxu0 0.0
    %691 = vmatprep.subr.mxu0 0.0
    %692 = vmatpush2.msra.mxu0 0.0
    %693 = vmatprep.subr.mxu0 0.0
    %694 = vmatpush2.msra.mxu0 0.0
    %695 = vmatprep.subr.mxu0 0.0
    %696 = vmatpush2.msra.mxu0 0.0
    %697 = vmatprep.subr.mxu0 0.0
    %698 = vmatpush2.msra.mxu0 0.0
    %699 = vmatprep.subr.mxu0 0.0
    %700 = vmatpush2.msra.mxu0 0.0
    %701 = vmatprep.subr.mxu0 0.0
    %702 = vmatpush2.msra.mxu0 0.0
    %703 = vmatprep.subr.mxu0 0.0
    %704 = vmatpush2.msra.mxu0 0.0
    %705 = vmatprep.mubr.f32.mxu0 0.0
    %706 = vmatmul.mubr.f32.gmra.mxu0 %v582
    %v707 = vpop.f32.mrf.mxu0
    %v708 = vadd.f32 0.0, %v707
    %v709 = vpop.f32.mrf.mxu0
    %v710 = vadd.f32 0.0, %v709
    %711 = vdwg.mxu0
    %712 = vmatprep.subr.mxu0 0.0
    %713 = vmatpush1.msra.mxu0 %v640
    %714 = vmatprep.subr.mxu0 0.0
    %715 = vmatpush1.msra.mxu0 %v637
    %716 = vmatprep.subr.mxu0 0.0
    %717 = vmatpush1.msra.mxu0 %v634
    %718 = vmatprep.subr.mxu0 0.0
    %719 = vmatpush1.msra.mxu0 %v631
    %720 = vmatprep.subr.mxu0 0.0
    %721 = vmatpush1.msra.mxu0 %v628
    %722 = vmatprep.subr.mxu0 0.0
    %723 = vmatpush1.msra.mxu0 %v625
    %724 = vmatprep.subr.mxu0 0.0
    %725 = vmatpush1.msra.mxu0 %v622
    %726 = vmatprep.subr.mxu0 0.0
    %727 = vmatpush1.msra.mxu0 %v619
    %728 = vmatprep.subr.mxu0 0.0
    %729 = vmatpush1.msra.mxu0 %v616
    %730 = vmatprep.subr.mxu0 0.0
    %731 = vmatpush1.msra.mxu0 %v613
    %732 = vmatprep.subr.mxu0 0.0
    %733 = vmatpush1.msra.mxu0 %v610
    %734 = vmatprep.subr.mxu0 0.0
    %735 = vmatpush1.msra.mxu0 %v607
    %736 = vmatprep.subr.mxu0 0.0
    %737 = vmatpush1.msra.mxu0 %v604
    %738 = vmatprep.subr.mxu0 0.0
    %739 = vmatpush1.msra.mxu0 %v601
    %740 = vmatprep.subr.mxu0 0.0
    %741 = vmatpush1.msra.mxu0 %v598
    %742 = vmatprep.subr.mxu0 0.0
    %743 = vmatpush1.msra.mxu0 %v595
    %744 = vmatprep.subr.mxu0 0.0
    %745 = vmatpush2.msra.mxu0 0.0
    %746 = vmatprep.subr.mxu0 0.0
    %747 = vmatpush2.msra.mxu0 0.0
    %748 = vmatprep.subr.mxu0 0.0
    %749 = vmatpush2.msra.mxu0 0.0
    %750 = vmatprep.subr.mxu0 0.0
    %751 = vmatpush2.msra.mxu0 0.0
    %752 = vmatprep.subr.mxu0 0.0
    %753 = vmatpush2.msra.mxu0 0.0
    %754 = vmatprep.subr.mxu0 0.0
    %755 = vmatpush2.msra.mxu0 0.0
    %756 = vmatprep.subr.mxu0 0.0
    %757 = vmatpush2.msra.mxu0 0.0
    %758 = vmatprep.subr.mxu0 0.0
    %759 = vmatpush2.msra.mxu0 0.0
    %760 = vmatprep.subr.mxu0 0.0
    %761 = vmatpush2.msra.mxu0 0.0
    %762 = vmatprep.subr.mxu0 0.0
    %763 = vmatpush2.msra.mxu0 0.0
    %764 = vmatprep.subr.mxu0 0.0
    %765 = vmatpush2.msra.mxu0 0.0
    %766 = vmatprep.subr.mxu0 0.0
    %767 = vmatpush2.msra.mxu0 0.0
    %768 = vmatprep.subr.mxu0 0.0
    %769 = vmatpush2.msra.mxu0 0.0
    %770 = vmatprep.subr.mxu0 0.0
    %771 = vmatpush2.msra.mxu0 0.0
    %772 = vmatprep.subr.mxu0 0.0
    %773 = vmatpush2.msra.mxu0 0.0
    %774 = vmatprep.subr.mxu0 0.0
    %775 = vmatpush2.msra.mxu0 0.0
    %776 = vmatprep.mubr.f32.mxu0 0.0
    %777 = vmatmul.mubr.f32.gmra.mxu0 %v582
    %v778 = vpop.f32.mrf.mxu0
    %v779 = vadd.f32 0.0, %v778
    %v780 = vpop.f32.mrf.mxu0
    %781 = vdwg.mxu0
    %v782 = vadd.f32 %v590, %v708
    %v783 = vadd.f32 %v591, %v710
    %v784 = vxor.u32 %v782, 2147483648
    %v785 = vxor.u32 %v783, 2147483648
    %v786 = vmul.f32 %v784, 1.442695
    %v787 = vpow.pop %v786
    %v788 = vmul.f32 %v785, 1.442695
    %v789 = vpow.pop %v788
    %v790 = vadd.f32 %v787, 1.0
    %v791 = vadd.f32 %v789, 1.0
    %v792 = vrcp.pop %v790
    %v793 = vmul.f32 1.0, %v792
    %v794 = vrcp.pop %v791
    %v795 = vmul.f32 1.0, %v794
    %v796 = vadd.f32 %v779, %v364
    %v797 = vmul.f32 %v793, %v796
    %v798 = vadd.f32 %v592, %v797
    %v799 = vtanh.pop %v798
    %v800 = vsub.f32 1.0, %v795
    %v801 = vmul.f32 %v800, %v799
    %v802 = vmul.f32 %v795, %v582
    %v803 = vadd.f32 %v801, %v802
    %s804 = scalar_lea.vmem [#allocation3], 8
    %805 = vst [vmem:[%s804] sm:$0xff] %v803
    %s806 = sadd.s32 0, 16
    %s807 = sshra.s32 %s806, 3
    %s808 = sand.u32 %s806, 7
    %s809 = smul.u32 %s807, 3
    %s810 = smul.addr %s809, 8
    %s811 = scalar_lea.vmem [#allocation2], %s810
    %v812 = vld [vmem:[%s811] sm:$0xff]
    %v813 = vld [vmem:[%s811 + $0x8] sm:$0xff]
    %v814 = vld [vmem:[%s811 + $0x10] sm:$0xff]
    %v815 = vld [vmem:[#allocation4] sm:$0xff]
    %v816 = vld [vmem:[#allocation4 + $0x8] sm:$0xff]
    %v817 = vld [vmem:[#allocation4 + $0x10] sm:$0xff]
    %v818 = vld [vmem:[#allocation4 + $0x18] sm:$0xff]
    %v819 = vld [vmem:[#allocation4 + $0x20] sm:$0xff]
    %v820 = vld [vmem:[#allocation4 + $0x28] sm:$0xff]
    %v821 = vld [vmem:[#allocation4 + $0x30] sm:$0xff]
    %v822 = vld [vmem:[#allocation4 + $0x38] sm:$0xff]
    %v823 = vld [vmem:[#allocation4 + $0x40] sm:$0xff]
    %v824 = vld [vmem:[#allocation4 + $0x48] sm:$0xff]
    %v825 = vld [vmem:[#allocation4 + $0x50] sm:$0xff]
    %v826 = vld [vmem:[#allocation4 + $0x58] sm:$0xff]
    %v827 = vld [vmem:[#allocation4 + $0x60] sm:$0xff]
    %v828 = vld [vmem:[#allocation4 + $0x68] sm:$0xff]
    %v829 = vld [vmem:[#allocation4 + $0x70] sm:$0xff]
    %v830 = vld [vmem:[#allocation4 + $0x78] sm:$0xff]
    %v831 = vld [vmem:[#allocation4 + $0x80] sm:$0xff]
    %v832 = vld [vmem:[#allocation4 + $0x88] sm:$0xff]
    %v833 = vld [vmem:[#allocation4 + $0x90] sm:$0xff]
    %v834 = vld [vmem:[#allocation4 + $0x98] sm:$0xff]
    %v835 = vld [vmem:[#allocation4 + $0xa0] sm:$0xff]
    %v836 = vld [vmem:[#allocation4 + $0xa8] sm:$0xff]
    %v837 = vld [vmem:[#allocation4 + $0xb0] sm:$0xff]
    %v838 = vld [vmem:[#allocation4 + $0xb8] sm:$0xff]
    %v839 = vld [vmem:[#allocation4 + $0xc0] sm:$0xff]
    %v840 = vld [vmem:[#allocation4 + $0xc8] sm:$0xff]
    %v841 = vld [vmem:[#allocation4 + $0xd0] sm:$0xff]
    %v842 = vld [vmem:[#allocation4 + $0xd8] sm:$0xff]
    %v843 = vld [vmem:[#allocation4 + $0xe0] sm:$0xff]
    %v844 = vld [vmem:[#allocation4 + $0xe8] sm:$0xff]
    %v845 = vld [vmem:[#allocation4 + $0xf0] sm:$0xff]
    %v846 = vld [vmem:[#allocation4 + $0xf8] sm:$0xff]
    %v847 = vld [vmem:[#allocation4 + $0x100] sm:$0xff]
    %v848 = vld [vmem:[#allocation4 + $0x108] sm:$0xff]
    %v849 = vld [vmem:[#allocation4 + $0x110] sm:$0xff]
    %v850 = vld [vmem:[#allocation4 + $0x118] sm:$0xff]
    %v851 = vld [vmem:[#allocation4 + $0x120] sm:$0xff]
    %v852 = vld [vmem:[#allocation4 + $0x128] sm:$0xff]
    %v853 = vld [vmem:[#allocation4 + $0x130] sm:$0xff]
    %v854 = vld [vmem:[#allocation4 + $0x138] sm:$0xff]
    %v855 = vld [vmem:[#allocation4 + $0x140] sm:$0xff]
    %v856 = vld [vmem:[#allocation4 + $0x148] sm:$0xff]
    %v857 = vld [vmem:[#allocation4 + $0x150] sm:$0xff]
    %v858 = vld [vmem:[#allocation4 + $0x158] sm:$0xff]
    %v859 = vld [vmem:[#allocation4 + $0x160] sm:$0xff]
    %v860 = vld [vmem:[#allocation4 + $0x168] sm:$0xff]
    %v861 = vld [vmem:[#allocation4 + $0x170] sm:$0xff]
    %v862 = vld [vmem:[#allocation4 + $0x178] sm:$0xff]
    %863 = vmatprep.subr.mxu0 %v861
    %864 = vmatpush1.msra.mxu0 %v860
    %865 = vmatprep.subr.mxu0 %v858
    %866 = vmatpush1.msra.mxu0 %v857
    %867 = vmatprep.subr.mxu0 %v855
    %868 = vmatpush1.msra.mxu0 %v854
    %869 = vmatprep.subr.mxu0 %v852
    %870 = vmatpush1.msra.mxu0 %v851
    %871 = vmatprep.subr.mxu0 %v849
    %872 = vmatpush1.msra.mxu0 %v848
    %873 = vmatprep.subr.mxu0 %v846
    %874 = vmatpush1.msra.mxu0 %v845
    %875 = vmatprep.subr.mxu0 %v843
    %876 = vmatpush1.msra.mxu0 %v842
    %877 = vmatprep.subr.mxu0 %v840
    %878 = vmatpush1.msra.mxu0 %v839
    %879 = vmatprep.subr.mxu0 %v837
    %880 = vmatpush1.msra.mxu0 %v836
    %881 = vmatprep.subr.mxu0 %v834
    %882 = vmatpush1.msra.mxu0 %v833
    %883 = vmatprep.subr.mxu0 %v831
    %884 = vmatpush1.msra.mxu0 %v830
    %885 = vmatprep.subr.mxu0 %v828
    %886 = vmatpush1.msra.mxu0 %v827
    %887 = vmatprep.subr.mxu0 %v825
    %888 = vmatpush1.msra.mxu0 %v824
    %889 = vmatprep.subr.mxu0 %v822
    %890 = vmatpush1.msra.mxu0 %v821
    %891 = vmatprep.subr.mxu0 %v819
    %892 = vmatpush1.msra.mxu0 %v818
    %893 = vmatprep.subr.mxu0 %v816
    %894 = vmatpush1.msra.mxu0 %v815
    %895 = vmatprep.subr.mxu0 0.0
    %896 = vmatpush2.msra.mxu0 0.0
    %897 = vmatprep.subr.mxu0 0.0
    %898 = vmatpush2.msra.mxu0 0.0
    %899 = vmatprep.subr.mxu0 0.0
    %900 = vmatpush2.msra.mxu0 0.0
    %901 = vmatprep.subr.mxu0 0.0
    %902 = vmatpush2.msra.mxu0 0.0
    %903 = vmatprep.subr.mxu0 0.0
    %904 = vmatpush2.msra.mxu0 0.0
    %905 = vmatprep.subr.mxu0 0.0
    %906 = vmatpush2.msra.mxu0 0.0
    %907 = vmatprep.subr.mxu0 0.0
    %908 = vmatpush2.msra.mxu0 0.0
    %909 = vmatprep.subr.mxu0 0.0
    %910 = vmatpush2.msra.mxu0 0.0
    %911 = vmatprep.subr.mxu0 0.0
    %912 = vmatpush2.msra.mxu0 0.0
    %913 = vmatprep.subr.mxu0 0.0
    %914 = vmatpush2.msra.mxu0 0.0
    %915 = vmatprep.subr.mxu0 0.0
    %916 = vmatpush2.msra.mxu0 0.0
    %917 = vmatprep.subr.mxu0 0.0
    %918 = vmatpush2.msra.mxu0 0.0
    %919 = vmatprep.subr.mxu0 0.0
    %920 = vmatpush2.msra.mxu0 0.0
    %921 = vmatprep.subr.mxu0 0.0
    %922 = vmatpush2.msra.mxu0 0.0
    %923 = vmatprep.subr.mxu0 0.0
    %924 = vmatpush2.msra.mxu0 0.0
    %925 = vmatprep.subr.mxu0 0.0
    %926 = vmatpush2.msra.mxu0 0.0
    %927 = vmatprep.mubr.f32.mxu0 0.0
    %928 = vmatmul.mubr.f32.gmra.mxu0 %v803
    %v929 = vpop.f32.mrf.mxu0
    %v930 = vadd.f32 0.0, %v929
    %v931 = vpop.f32.mrf.mxu0
    %v932 = vadd.f32 0.0, %v931
    %933 = vdwg.mxu0
    %934 = vmatprep.subr.mxu0 0.0
    %935 = vmatpush1.msra.mxu0 %v862
    %936 = vmatprep.subr.mxu0 0.0
    %937 = vmatpush1.msra.mxu0 %v859
    %938 = vmatprep.subr.mxu0 0.0
    %939 = vmatpush1.msra.mxu0 %v856
    %940 = vmatprep.subr.mxu0 0.0
    %941 = vmatpush1.msra.mxu0 %v853
    %942 = vmatprep.subr.mxu0 0.0
    %943 = vmatpush1.msra.mxu0 %v850
    %944 = vmatprep.subr.mxu0 0.0
    %945 = vmatpush1.msra.mxu0 %v847
    %946 = vmatprep.subr.mxu0 0.0
    %947 = vmatpush1.msra.mxu0 %v844
    %948 = vmatprep.subr.mxu0 0.0
    %949 = vmatpush1.msra.mxu0 %v841
    %950 = vmatprep.subr.mxu0 0.0
    %951 = vmatpush1.msra.mxu0 %v838
    %952 = vmatprep.subr.mxu0 0.0
    %953 = vmatpush1.msra.mxu0 %v835
    %954 = vmatprep.subr.mxu0 0.0
    %955 = vmatpush1.msra.mxu0 %v832
    %956 = vmatprep.subr.mxu0 0.0
    %957 = vmatpush1.msra.mxu0 %v829
    %958 = vmatprep.subr.mxu0 0.0
    %959 = vmatpush1.msra.mxu0 %v826
    %960 = vmatprep.subr.mxu0 0.0
    %961 = vmatpush1.msra.mxu0 %v823
    %962 = vmatprep.subr.mxu0 0.0
    %963 = vmatpush1.msra.mxu0 %v820
    %964 = vmatprep.subr.mxu0 0.0
    %965 = vmatpush1.msra.mxu0 %v817
    %966 = vmatprep.subr.mxu0 0.0
    %967 = vmatpush2.msra.mxu0 0.0
    %968 = vmatprep.subr.mxu0 0.0
    %969 = vmatpush2.msra.mxu0 0.0
    %970 = vmatprep.subr.mxu0 0.0
    %971 = vmatpush2.msra.mxu0 0.0
    %972 = vmatprep.subr.mxu0 0.0
    %973 = vmatpush2.msra.mxu0 0.0
    %974 = vmatprep.subr.mxu0 0.0
    %975 = vmatpush2.msra.mxu0 0.0
    %976 = vmatprep.subr.mxu0 0.0
    %977 = vmatpush2.msra.mxu0 0.0
    %978 = vmatprep.subr.mxu0 0.0
    %979 = vmatpush2.msra.mxu0 0.0
    %980 = vmatprep.subr.mxu0 0.0
    %981 = vmatpush2.msra.mxu0 0.0
    %982 = vmatprep.subr.mxu0 0.0
    %983 = vmatpush2.msra.mxu0 0.0
    %984 = vmatprep.subr.mxu0 0.0
    %985 = vmatpush2.msra.mxu0 0.0
    %986 = vmatprep.subr.mxu0 0.0
    %987 = vmatpush2.msra.mxu0 0.0
    %988 = vmatprep.subr.mxu0 0.0
    %989 = vmatpush2.msra.mxu0 0.0
    %990 = vmatprep.subr.mxu0 0.0
    %991 = vmatpush2.msra.mxu0 0.0
    %992 = vmatprep.subr.mxu0 0.0
    %993 = vmatpush2.msra.mxu0 0.0
    %994 = vmatprep.subr.mxu0 0.0
    %995 = vmatpush2.msra.mxu0 0.0
    %996 = vmatprep.subr.mxu0 0.0
    %997 = vmatpush2.msra.mxu0 0.0
    %998 = vmatprep.mubr.f32.mxu0 0.0
    %999 = vmatmul.mubr.f32.gmra.mxu0 %v803
    %v1000 = vpop.f32.mrf.mxu0
    %v1001 = vadd.f32 0.0, %v1000
    %v1002 = vpop.f32.mrf.mxu0
    %1003 = vdwg.mxu0
    %v1004 = vadd.f32 %v812, %v930
    %v1005 = vadd.f32 %v813, %v932
    %v1006 = vxor.u32 %v1004, 2147483648
    %v1007 = vxor.u32 %v1005, 2147483648
    %v1008 = vmul.f32 %v1006, 1.442695
    %v1009 = vpow.pop %v1008
    %v1010 = vmul.f32 %v1007, 1.442695
    %v1011 = vpow.pop %v1010
    %v1012 = vadd.f32 %v1009, 1.0
    %v1013 = vadd.f32 %v1011, 1.0
    %v1014 = vrcp.pop %v1012
    %v1015 = vmul.f32 1.0, %v1014
    %v1016 = vrcp.pop %v1013
    %v1017 = vmul.f32 1.0, %v1016
    %v1018 = vadd.f32 %v1001, %v364
    %v1019 = vmul.f32 %v1015, %v1018
    %v1020 = vadd.f32 %v814, %v1019
    %v1021 = vtanh.pop %v1020
    %v1022 = vsub.f32 1.0, %v1017
    %v1023 = vmul.f32 %v1022, %v1021
    %v1024 = vmul.f32 %v1017, %v803
    %v1025 = vadd.f32 %v1023, %v1024
    %s1026 = scalar_lea.vmem [#allocation3], 16
    %1027 = vst [vmem:[%s1026] sm:$0xff] %v1025
    %s1028 = sadd.s32 0, 24
    %s1029 = sshra.s32 %s1028, 3
    %s1030 = sand.u32 %s1028, 7
    %s1031 = smul.u32 %s1029, 3
    %s1032 = smul.addr %s1031, 8
    %s1033 = scalar_lea.vmem [#allocation2], %s1032
    %v1034 = vld [vmem:[%s1033] sm:$0xff]
    %v1035 = vld [vmem:[%s1033 + $0x8] sm:$0xff]
    %v1036 = vld [vmem:[%s1033 + $0x10] sm:$0xff]
    %v1037 = vld [vmem:[#allocation4] sm:$0xff]
    %v1038 = vld [vmem:[#allocation4 + $0x8] sm:$0xff]
    %v1039 = vld [vmem:[#allocation4 + $0x10] sm:$0xff]
    %v1040 = vld [vmem:[#allocation4 + $0x18] sm:$0xff]
    %v1041 = vld [vmem:[#allocation4 + $0x20] sm:$0xff]
    %v1042 = vld [vmem:[#allocation4 + $0x28] sm:$0xff]
    %v1043 = vld [vmem:[#allocation4 + $0x30] sm:$0xff]
    %v1044 = vld [vmem:[#allocation4 + $0x38] sm:$0xff]
    %v1045 = vld [vmem:[#allocation4 + $0x40] sm:$0xff]
    %v1046 = vld [vmem:[#allocation4 + $0x48] sm:$0xff]
    %v1047 = vld [vmem:[#allocation4 + $0x50] sm:$0xff]
    %v1048 = vld [vmem:[#allocation4 + $0x58] sm:$0xff]
    %v1049 = vld [vmem:[#allocation4 + $0x60] sm:$0xff]
    %v1050 = vld [vmem:[#allocation4 + $0x68] sm:$0xff]
    %v1051 = vld [vmem:[#allocation4 + $0x70] sm:$0xff]
    %v1052 = vld [vmem:[#allocation4 + $0x78] sm:$0xff]
    %v1053 = vld [vmem:[#allocation4 + $0x80] sm:$0xff]
    %v1054 = vld [vmem:[#allocation4 + $0x88] sm:$0xff]
    %v1055 = vld [vmem:[#allocation4 + $0x90] sm:$0xff]
    %v1056 = vld [vmem:[#allocation4 + $0x98] sm:$0xff]
    %v1057 = vld [vmem:[#allocation4 + $0xa0] sm:$0xff]
    %v1058 = vld [vmem:[#allocation4 + $0xa8] sm:$0xff]
    %v1059 = vld [vmem:[#allocation4 + $0xb0] sm:$0xff]
    %v1060 = vld [vmem:[#allocation4 + $0xb8] sm:$0xff]
    %v1061 = vld [vmem:[#allocation4 + $0xc0] sm:$0xff]
    %v1062 = vld [vmem:[#allocation4 + $0xc8] sm:$0xff]
    %v1063 = vld [vmem:[#allocation4 + $0xd0] sm:$0xff]
    %v1064 = vld [vmem:[#allocation4 + $0xd8] sm:$0xff]
    %v1065 = vld [vmem:[#allocation4 + $0xe0] sm:$0xff]
    %v1066 = vld [vmem:[#allocation4 + $0xe8] sm:$0xff]
    %v1067 = vld [vmem:[#allocation4 + $0xf0] sm:$0xff]
    %v1068 = vld [vmem:[#allocation4 + $0xf8] sm:$0xff]
    %v1069 = vld [vmem:[#allocation4 + $0x100] sm:$0xff]
    %v1070 = vld [vmem:[#allocation4 + $0x108] sm:$0xff]
    %v1071 = vld [vmem:[#allocation4 + $0x110] sm:$0xff]
    %v1072 = vld [vmem:[#allocation4 + $0x118] sm:$0xff]
    %v1073 = vld [vmem:[#allocation4 + $0x120] sm:$0xff]
    %v1074 = vld [vmem:[#allocation4 + $0x128] sm:$0xff]
    %v1075 = vld [vmem:[#allocation4 + $0x130] sm:$0xff]
    %v1076 = vld [vmem:[#allocation4 + $0x138] sm:$0xff]
    %v1077 = vld [vmem:[#allocation4 + $0x140] sm:$0xff]
    %v1078 = vld [vmem:[#allocation4 + $0x148] sm:$0xff]
    %v1079 = vld [vmem:[#allocation4 + $0x150] sm:$0xff]
    %v1080 = vld [vmem:[#allocation4 + $0x158] sm:$0xff]
    %v1081 = vld [vmem:[#allocation4 + $0x160] sm:$0xff]
    %v1082 = vld [vmem:[#allocation4 + $0x168] sm:$0xff]
    %v1083 = vld [vmem:[#allocation4 + $0x170] sm:$0xff]
    %v1084 = vld [vmem:[#allocation4 + $0x178] sm:$0xff]
    %1085 = vmatprep.subr.mxu0 %v1083
    %1086 = vmatpush1.msra.mxu0 %v1082
    %1087 = vmatprep.subr.mxu0 %v1080
    %1088 = vmatpush1.msra.mxu0 %v1079
    %1089 = vmatprep.subr.mxu0 %v1077
    %1090 = vmatpush1.msra.mxu0 %v1076
    %1091 = vmatprep.subr.mxu0 %v1074
    %1092 = vmatpush1.msra.mxu0 %v1073
    %1093 = vmatprep.subr.mxu0 %v1071
    %1094 = vmatpush1.msra.mxu0 %v1070
    %1095 = vmatprep.subr.mxu0 %v1068
    %1096 = vmatpush1.msra.mxu0 %v1067
    %1097 = vmatprep.subr.mxu0 %v1065
    %1098 = vmatpush1.msra.mxu0 %v1064
    %1099 = vmatprep.subr.mxu0 %v1062
    %1100 = vmatpush1.msra.mxu0 %v1061
    %1101 = vmatprep.subr.mxu0 %v1059
    %1102 = vmatpush1.msra.mxu0 %v1058
    %1103 = vmatprep.subr.mxu0 %v1056
    %1104 = vmatpush1.msra.mxu0 %v1055
    %1105 = vmatprep.subr.mxu0 %v1053
    %1106 = vmatpush1.msra.mxu0 %v1052
    %1107 = vmatprep.subr.mxu0 %v1050
    %1108 = vmatpush1.msra.mxu0 %v1049
    %1109 = vmatprep.subr.mxu0 %v1047
    %1110 = vmatpush1.msra.mxu0 %v1046
    %1111 = vmatprep.subr.mxu0 %v1044
    %1112 = vmatpush1.msra.mxu0 %v1043
    %1113 = vmatprep.subr.mxu0 %v1041
    %1114 = vmatpush1.msra.mxu0 %v1040
    %1115 = vmatprep.subr.mxu0 %v1038
    %1116 = vmatpush1.msra.mxu0 %v1037
    %1117 = vmatprep.subr.mxu0 0.0
    %1118 = vmatpush2.msra.mxu0 0.0
    %1119 = vmatprep.subr.mxu0 0.0
    %1120 = vmatpush2.msra.mxu0 0.0
    %1121 = vmatprep.subr.mxu0 0.0
    %1122 = vmatpush2.msra.mxu0 0.0
    %1123 = vmatprep.subr.mxu0 0.0
    %1124 = vmatpush2.msra.mxu0 0.0
    %1125 = vmatprep.subr.mxu0 0.0
    %1126 = vmatpush2.msra.mxu0 0.0
    %1127 = vmatprep.subr.mxu0 0.0
    %1128 = vmatpush2.msra.mxu0 0.0
    %1129 = vmatprep.subr.mxu0 0.0
    %1130 = vmatpush2.msra.mxu0 0.0
    %1131 = vmatprep.subr.mxu0 0.0
    %1132 = vmatpush2.msra.mxu0 0.0
    %1133 = vmatprep.subr.mxu0 0.0
    %1134 = vmatpush2.msra.mxu0 0.0
    %1135 = vmatprep.subr.mxu0 0.0
    %1136 = vmatpush2.msra.mxu0 0.0
    %1137 = vmatprep.subr.mxu0 0.0
    %1138 = vmatpush2.msra.mxu0 0.0
    %1139 = vmatprep.subr.mxu0 0.0
    %1140 = vmatpush2.msra.mxu0 0.0
    %1141 = vmatprep.subr.mxu0 0.0
    %1142 = vmatpush2.msra.mxu0 0.0
    %1143 = vmatprep.subr.mxu0 0.0
    %1144 = vmatpush2.msra.mxu0 0.0
    %1145 = vmatprep.subr.mxu0 0.0
    %1146 = vmatpush2.msra.mxu0 0.0
    %1147 = vmatprep.subr.mxu0 0.0
    %1148 = vmatpush2.msra.mxu0 0.0
    %1149 = vmatprep.mubr.f32.mxu0 0.0
    %1150 = vmatmul.mubr.f32.gmra.mxu0 %v1025
    %v1151 = vpop.f32.mrf.mxu0
    %v1152 = vadd.f32 0.0, %v1151
    %v1153 = vpop.f32.mrf.mxu0
    %v1154 = vadd.f32 0.0, %v1153
    %1155 = vdwg.mxu0
    %1156 = vmatprep.subr.mxu0 0.0
    %1157 = vmatpush1.msra.mxu0 %v1084
    %1158 = vmatprep.subr.mxu0 0.0
    %1159 = vmatpush1.msra.mxu0 %v1081
    %1160 = vmatprep.subr.mxu0 0.0
    %1161 = vmatpush1.msra.mxu0 %v1078
    %1162 = vmatprep.subr.mxu0 0.0
    %1163 = vmatpush1.msra.mxu0 %v1075
    %1164 = vmatprep.subr.mxu0 0.0
    %1165 = vmatpush1.msra.mxu0 %v1072
    %1166 = vmatprep.subr.mxu0 0.0
    %1167 = vmatpush1.msra.mxu0 %v1069
    %1168 = vmatprep.subr.mxu0 0.0
    %1169 = vmatpush1.msra.mxu0 %v1066
    %1170 = vmatprep.subr.mxu0 0.0
    %1171 = vmatpush1.msra.mxu0 %v1063
    %1172 = vmatprep.subr.mxu0 0.0
    %1173 = vmatpush1.msra.mxu0 %v1060
    %1174 = vmatprep.subr.mxu0 0.0
    %1175 = vmatpush1.msra.mxu0 %v1057
    %1176 = vmatprep.subr.mxu0 0.0
    %1177 = vmatpush1.msra.mxu0 %v1054
    %1178 = vmatprep.subr.mxu0 0.0
    %1179 = vmatpush1.msra.mxu0 %v1051
    %1180 = vmatprep.subr.mxu0 0.0
    %1181 = vmatpush1.msra.mxu0 %v1048
    %1182 = vmatprep.subr.mxu0 0.0
    %1183 = vmatpush1.msra.mxu0 %v1045
    %1184 = vmatprep.subr.mxu0 0.0
    %1185 = vmatpush1.msra.mxu0 %v1042
    %1186 = vmatprep.subr.mxu0 0.0
    %1187 = vmatpush1.msra.mxu0 %v1039
    %1188 = vmatprep.subr.mxu0 0.0
    %1189 = vmatpush2.msra.mxu0 0.0
    %1190 = vmatprep.subr.mxu0 0.0
    %1191 = vmatpush2.msra.mxu0 0.0
    %1192 = vmatprep.subr.mxu0 0.0
    %1193 = vmatpush2.msra.mxu0 0.0
    %1194 = vmatprep.subr.mxu0 0.0
    %1195 = vmatpush2.msra.mxu0 0.0
    %1196 = vmatprep.subr.mxu0 0.0
    %1197 = vmatpush2.msra.mxu0 0.0
    %1198 = vmatprep.subr.mxu0 0.0
    %1199 = vmatpush2.msra.mxu0 0.0
    %1200 = vmatprep.subr.mxu0 0.0
    %1201 = vmatpush2.msra.mxu0 0.0
    %1202 = vmatprep.subr.mxu0 0.0
    %1203 = vmatpush2.msra.mxu0 0.0
    %1204 = vmatprep.subr.mxu0 0.0
    %1205 = vmatpush2.msra.mxu0 0.0
    %1206 = vmatprep.subr.mxu0 0.0
    %1207 = vmatpush2.msra.mxu0 0.0
    %1208 = vmatprep.subr.mxu0 0.0
    %1209 = vmatpush2.msra.mxu0 0.0
    %1210 = vmatprep.subr.mxu0 0.0
    %1211 = vmatpush2.msra.mxu0 0.0
    %1212 = vmatprep.subr.mxu0 0.0
    %1213 = vmatpush2.msra.mxu0 0.0
    %1214 = vmatprep.subr.mxu0 0.0
    %1215 = vmatpush2.msra.mxu0 0.0
    %1216 = vmatprep.subr.mxu0 0.0
    %1217 = vmatpush2.msra.mxu0 0.0
    %1218 = vmatprep.subr.mxu0 0.0
    %1219 = vmatpush2.msra.mxu0 0.0
    %1220 = vmatprep.mubr.f32.mxu0 0.0
    %1221 = vmatmul.mubr.f32.gmra.mxu0 %v1025
    %v1222 = vpop.f32.mrf.mxu0
    %v1223 = vadd.f32 0.0, %v1222
    %v1224 = vpop.f32.mrf.mxu0
    %1225 = vdwg.mxu0
    %v1226 = vadd.f32 %v1034, %v1152
    %v1227 = vadd.f32 %v1035, %v1154
    %v1228 = vxor.u32 %v1226, 2147483648
    %v1229 = vxor.u32 %v1227, 2147483648
    %v1230 = vmul.f32 %v1228, 1.442695
    %v1231 = vpow.pop %v1230
    %v1232 = vmul.f32 %v1229, 1.442695
    %v1233 = vpow.pop %v1232
    %v1234 = vadd.f32 %v1231, 1.0
    %v1235 = vadd.f32 %v1233, 1.0
    %v1236 = vrcp.pop %v1234
    %v1237 = vmul.f32 1.0, %v1236
    %v1238 = vrcp.pop %v1235
    %v1239 = vmul.f32 1.0, %v1238
    %v1240 = vadd.f32 %v1223, %v364
    %v1241 = vmul.f32 %v1237, %v1240
    %v1242 = vadd.f32 %v1036, %v1241
    %v1243 = vtanh.pop %v1242
    %v1244 = vsub.f32 1.0, %v1239
    %v1245 = vmul.f32 %v1244, %v1243
    %v1246 = vmul.f32 %v1239, %v1025
    %v1247 = vadd.f32 %v1245, %v1246
    %s1248 = scalar_lea.vmem [#allocation3], 24
    %1249 = vst [vmem:[%s1248] sm:$0xff] %v1247
    %s1250 = sadd.s32 0, 32
    %s1251 = sshra.s32 %s1250, 3
    %s1252 = sand.u32 %s1250, 7
    %s1253 = smul.u32 %s1251, 3
    %s1254 = smul.addr %s1253, 8
    %s1255 = scalar_lea.vmem [#allocation2], %s1254
    %v1256 = vld [vmem:[%s1255] sm:$0xff]
    %v1257 = vld [vmem:[%s1255 + $0x8] sm:$0xff]
    %v1258 = vld [vmem:[%s1255 + $0x10] sm:$0xff]
    %v1259 = vld [vmem:[#allocation4] sm:$0xff]
    %v1260 = vld [vmem:[#allocation4 + $0x8] sm:$0xff]
    %v1261 = vld [vmem:[#allocation4 + $0x10] sm:$0xff]
    %v1262 = vld [vmem:[#allocation4 + $0x18] sm:$0xff]
    %v1263 = vld [vmem:[#allocation4 + $0x20] sm:$0xff]
    %v1264 = vld [vmem:[#allocation4 + $0x28] sm:$0xff]
    %v1265 = vld [vmem:[#allocation4 + $0x30] sm:$0xff]
    %v1266 = vld [vmem:[#allocation4 + $0x38] sm:$0xff]
    %v1267 = vld [vmem:[#allocation4 + $0x40] sm:$0xff]
    %v1268 = vld [vmem:[#allocation4 + $0x48] sm:$0xff]
    %v1269 = vld [vmem:[#allocation4 + $0x50] sm:$0xff]
    %v1270 = vld [vmem:[#allocation4 + $0x58] sm:$0xff]
    %v1271 = vld [vmem:[#allocation4 + $0x60] sm:$0xff]
    %v1272 = vld [vmem:[#allocation4 + $0x68] sm:$0xff]
    %v1273 = vld [vmem:[#allocation4 + $0x70] sm:$0xff]
    %v1274 = vld [vmem:[#allocation4 + $0x78] sm:$0xff]
    %v1275 = vld [vmem:[#allocation4 + $0x80] sm:$0xff]
    %v1276 = vld [vmem:[#allocation4 + $0x88] sm:$0xff]
    %v1277 = vld [vmem:[#allocation4 + $0x90] sm:$0xff]
    %v1278 = vld [vmem:[#allocation4 + $0x98] sm:$0xff]
    %v1279 = vld [vmem:[#allocation4 + $0xa0] sm:$0xff]
    %v1280 = vld [vmem:[#allocation4 + $0xa8] sm:$0xff]
    %v1281 = vld [vmem:[#allocation4 + $0xb0] sm:$0xff]
    %v1282 = vld [vmem:[#allocation4 + $0xb8] sm:$0xff]
    %v1283 = vld [vmem:[#allocation4 + $0xc0] sm:$0xff]
    %v1284 = vld [vmem:[#allocation4 + $0xc8] sm:$0xff]
    %v1285 = vld [vmem:[#allocation4 + $0xd0] sm:$0xff]
    %v1286 = vld [vmem:[#allocation4 + $0xd8] sm:$0xff]
    %v1287 = vld [vmem:[#allocation4 + $0xe0] sm:$0xff]
    %v1288 = vld [vmem:[#allocation4 + $0xe8] sm:$0xff]
    %v1289 = vld [vmem:[#allocation4 + $0xf0] sm:$0xff]
    %v1290 = vld [vmem:[#allocation4 + $0xf8] sm:$0xff]
    %v1291 = vld [vmem:[#allocation4 + $0x100] sm:$0xff]
    %v1292 = vld [vmem:[#allocation4 + $0x108] sm:$0xff]
    %v1293 = vld [vmem:[#allocation4 + $0x110] sm:$0xff]
    %v1294 = vld [vmem:[#allocation4 + $0x118] sm:$0xff]
    %v1295 = vld [vmem:[#allocation4 + $0x120] sm:$0xff]
    %v1296 = vld [vmem:[#allocation4 + $0x128] sm:$0xff]
    %v1297 = vld [vmem:[#allocation4 + $0x130] sm:$0xff]
    %v1298 = vld [vmem:[#allocation4 + $0x138] sm:$0xff]
    %v1299 = vld [vmem:[#allocation4 + $0x140] sm:$0xff]
    %v1300 = vld [vmem:[#allocation4 + $0x148] sm:$0xff]
    %v1301 = vld [vmem:[#allocation4 + $0x150] sm:$0xff]
    %v1302 = vld [vmem:[#allocation4 + $0x158] sm:$0xff]
    %v1303 = vld [vmem:[#allocation4 + $0x160] sm:$0xff]
    %v1304 = vld [vmem:[#allocation4 + $0x168] sm:$0xff]
    %v1305 = vld [vmem:[#allocation4 + $0x170] sm:$0xff]
    %v1306 = vld [vmem:[#allocation4 + $0x178] sm:$0xff]
    %1307 = vmatprep.subr.mxu0 %v1305
    %1308 = vmatpush1.msra.mxu0 %v1304
    %1309 = vmatprep.subr.mxu0 %v1302
    %1310 = vmatpush1.msra.mxu0 %v1301
    %1311 = vmatprep.subr.mxu0 %v1299
    %1312 = vmatpush1.msra.mxu0 %v1298
    %1313 = vmatprep.subr.mxu0 %v1296
    %1314 = vmatpush1.msra.mxu0 %v1295
    %1315 = vmatprep.subr.mxu0 %v1293
    %1316 = vmatpush1.msra.mxu0 %v1292
    %1317 = vmatprep.subr.mxu0 %v1290
    %1318 = vmatpush1.msra.mxu0 %v1289
    %1319 = vmatprep.subr.mxu0 %v1287
    %1320 = vmatpush1.msra.mxu0 %v1286
    %1321 = vmatprep.subr.mxu0 %v1284
    %1322 = vmatpush1.msra.mxu0 %v1283
    %1323 = vmatprep.subr.mxu0 %v1281
    %1324 = vmatpush1.msra.mxu0 %v1280
    %1325 = vmatprep.subr.mxu0 %v1278
    %1326 = vmatpush1.msra.mxu0 %v1277
    %1327 = vmatprep.subr.mxu0 %v1275
    %1328 = vmatpush1.msra.mxu0 %v1274
    %1329 = vmatprep.subr.mxu0 %v1272
    %1330 = vmatpush1.msra.mxu0 %v1271
    %1331 = vmatprep.subr.mxu0 %v1269
    %1332 = vmatpush1.msra.mxu0 %v1268
    %1333 = vmatprep.subr.mxu0 %v1266
    %1334 = vmatpush1.msra.mxu0 %v1265
    %1335 = vmatprep.subr.mxu0 %v1263
    %1336 = vmatpush1.msra.mxu0 %v1262
    %1337 = vmatprep.subr.mxu0 %v1260
    %1338 = vmatpush1.msra.mxu0 %v1259
    %1339 = vmatprep.subr.mxu0 0.0
    %1340 = vmatpush2.msra.mxu0 0.0
    %1341 = vmatprep.subr.mxu0 0.0
    %1342 = vmatpush2.msra.mxu0 0.0
    %1343 = vmatprep.subr.mxu0 0.0
    %1344 = vmatpush2.msra.mxu0 0.0
    %1345 = vmatprep.subr.mxu0 0.0
    %1346 = vmatpush2.msra.mxu0 0.0
    %1347 = vmatprep.subr.mxu0 0.0
    %1348 = vmatpush2.msra.mxu0 0.0
    %1349 = vmatprep.subr.mxu0 0.0
    %1350 = vmatpush2.msra.mxu0 0.0
    %1351 = vmatprep.subr.mxu0 0.0
    %1352 = vmatpush2.msra.mxu0 0.0
    %1353 = vmatprep.subr.mxu0 0.0
    %1354 = vmatpush2.msra.mxu0 0.0
    %1355 = vmatprep.subr.mxu0 0.0
    %1356 = vmatpush2.msra.mxu0 0.0
    %1357 = vmatprep.subr.mxu0 0.0
    %1358 = vmatpush2.msra.mxu0 0.0
    %1359 = vmatprep.subr.mxu0 0.0
    %1360 = vmatpush2.msra.mxu0 0.0
    %1361 = vmatprep.subr.mxu0 0.0
    %1362 = vmatpush2.msra.mxu0 0.0
    %1363 = vmatprep.subr.mxu0 0.0
    %1364 = vmatpush2.msra.mxu0 0.0
    %1365 = vmatprep.subr.mxu0 0.0
    %1366 = vmatpush2.msra.mxu0 0.0
    %1367 = vmatprep.subr.mxu0 0.0
    %1368 = vmatpush2.msra.mxu0 0.0
    %1369 = vmatprep.subr.mxu0 0.0
    %1370 = vmatpush2.msra.mxu0 0.0
    %1371 = vmatprep.mubr.f32.mxu0 0.0
    %1372 = vmatmul.mubr.f32.gmra.mxu0 %v1247
    %v1373 = vpop.f32.mrf.mxu0
    %v1374 = vadd.f32 0.0, %v1373
    %v1375 = vpop.f32.mrf.mxu0
    %v1376 = vadd.f32 0.0, %v1375
    %1377 = vdwg.mxu0
    %1378 = vmatprep.subr.mxu0 0.0
    %1379 = vmatpush1.msra.mxu0 %v1306
    %1380 = vmatprep.subr.mxu0 0.0
    %1381 = vmatpush1.msra.mxu0 %v1303
    %1382 = vmatprep.subr.mxu0 0.0
    %1383 = vmatpush1.msra.mxu0 %v1300
    %1384 = vmatprep.subr.mxu0 0.0
    %1385 = vmatpush1.msra.mxu0 %v1297
    %1386 = vmatprep.subr.mxu0 0.0
    %1387 = vmatpush1.msra.mxu0 %v1294
    %1388 = vmatprep.subr.mxu0 0.0
    %1389 = vmatpush1.msra.mxu0 %v1291
    %1390 = vmatprep.subr.mxu0 0.0
    %1391 = vmatpush1.msra.mxu0 %v1288
    %1392 = vmatprep.subr.mxu0 0.0
    %1393 = vmatpush1.msra.mxu0 %v1285
    %1394 = vmatprep.subr.mxu0 0.0
    %1395 = vmatpush1.msra.mxu0 %v1282
    %1396 = vmatprep.subr.mxu0 0.0
    %1397 = vmatpush1.msra.mxu0 %v1279
    %1398 = vmatprep.subr.mxu0 0.0
    %1399 = vmatpush1.msra.mxu0 %v1276
    %1400 = vmatprep.subr.mxu0 0.0
    %1401 = vmatpush1.msra.mxu0 %v1273
    %1402 = vmatprep.subr.mxu0 0.0
    %1403 = vmatpush1.msra.mxu0 %v1270
    %1404 = vmatprep.subr.mxu0 0.0
    %1405 = vmatpush1.msra.mxu0 %v1267
    %1406 = vmatprep.subr.mxu0 0.0
    %1407 = vmatpush1.msra.mxu0 %v1264
    %1408 = vmatprep.subr.mxu0 0.0
    %1409 = vmatpush1.msra.mxu0 %v1261
    %1410 = vmatprep.subr.mxu0 0.0
    %1411 = vmatpush2.msra.mxu0 0.0
    %1412 = vmatprep.subr.mxu0 0.0
    %1413 = vmatpush2.msra.mxu0 0.0
    %1414 = vmatprep.subr.mxu0 0.0
    %1415 = vmatpush2.msra.mxu0 0.0
    %1416 = vmatprep.subr.mxu0 0.0
    %1417 = vmatpush2.msra.mxu0 0.0
    %1418 = vmatprep.subr.mxu0 0.0
    %1419 = vmatpush2.msra.mxu0 0.0
    %1420 = vmatprep.subr.mxu0 0.0
    %1421 = vmatpush2.msra.mxu0 0.0
    %1422 = vmatprep.subr.mxu0 0.0
    %1423 = vmatpush2.msra.mxu0 0.0
    %1424 = vmatprep.subr.mxu0 0.0
    %1425 = vmatpush2.msra.mxu0 0.0
    %1426 = vmatprep.subr.mxu0 0.0
    %1427 = vmatpush2.msra.mxu0 0.0
    %1428 = vmatprep.subr.mxu0 0.0
    %1429 = vmatpush2.msra.mxu0 0.0
    %1430 = vmatprep.subr.mxu0 0.0
    %1431 = vmatpush2.msra.mxu0 0.0
    %1432 = vmatprep.subr.mxu0 0.0
    %1433 = vmatpush2.msra.mxu0 0.0
    %1434 = vmatprep.subr.mxu0 0.0
    %1435 = vmatpush2.msra.mxu0 0.0
    %1436 = vmatprep.subr.mxu0 0.0
    %1437 = vmatpush2.msra.mxu0 0.0
    %1438 = vmatprep.subr.mxu0 0.0
    %1439 = vmatpush2.msra.mxu0 0.0
    %1440 = vmatprep.subr.mxu0 0.0
    %1441 = vmatpush2.msra.mxu0 0.0
    %1442 = vmatprep.mubr.f32.mxu0 0.0
    %1443 = vmatmul.mubr.f32.gmra.mxu0 %v1247
    %v1444 = vpop.f32.mrf.mxu0
    %v1445 = vadd.f32 0.0, %v1444
    %v1446 = vpop.f32.mrf.mxu0
    %1447 = vdwg.mxu0
    %v1448 = vadd.f32 %v1256, %v1374
    %v1449 = vadd.f32 %v1257, %v1376
    %v1450 = vxor.u32 %v1448, 2147483648
    %v1451 = vxor.u32 %v1449, 2147483648
    %v1452 = vmul.f32 %v1450, 1.442695
    %v1453 = vpow.pop %v1452
    %v1454 = vmul.f32 %v1451, 1.442695
    %v1455 = vpow.pop %v1454
    %v1456 = vadd.f32 %v1453, 1.0
    %v1457 = vadd.f32 %v1455, 1.0
    %v1458 = vrcp.pop %v1456
    %v1459 = vmul.f32 1.0, %v1458
    %v1460 = vrcp.pop %v1457
    %v1461 = vmul.f32 1.0, %v1460
    %v1462 = vadd.f32 %v1445, %v364
    %v1463 = vmul.f32 %v1459, %v1462
    %v1464 = vadd.f32 %v1258, %v1463
    %v1465 = vtanh.pop %v1464
    %v1466 = vsub.f32 1.0, %v1461
    %v1467 = vmul.f32 %v1466, %v1465
    %v1468 = vmul.f32 %v1461, %v1247
    %v1469 = vadd.f32 %v1467, %v1468
    %s1470 = scalar_lea.vmem [#allocation3], 32
    %1471 = vst [vmem:[%s1470] sm:$0xff] %v1469
    %s1472 = sadd.s32 0, 40
    %s1473 = sshra.s32 %s1472, 3
    %s1474 = sand.u32 %s1472, 7
    %s1475 = smul.u32 %s1473, 3
    %s1476 = smul.addr %s1475, 8
    %s1477 = scalar_lea.vmem [#allocation2], %s1476
    %v1478 = vld [vmem:[%s1477] sm:$0xff]
    %v1479 = vld [vmem:[%s1477 + $0x8] sm:$0xff]
    %v1480 = vld [vmem:[%s1477 + $0x10] sm:$0xff]
    %v1481 = vld [vmem:[#allocation4] sm:$0xff]
    %v1482 = vld [vmem:[#allocation4 + $0x8] sm:$0xff]
    %v1483 = vld [vmem:[#allocation4 + $0x10] sm:$0xff]
    %v1484 = vld [vmem:[#allocation4 + $0x18] sm:$0xff]
    %v1485 = vld [vmem:[#allocation4 + $0x20] sm:$0xff]
    %v1486 = vld [vmem:[#allocation4 + $0x28] sm:$0xff]
    %v1487 = vld [vmem:[#allocation4 + $0x30] sm:$0xff]
    %v1488 = vld [vmem:[#allocation4 + $0x38] sm:$0xff]
    %v1489 = vld [vmem:[#allocation4 + $0x40] sm:$0xff]
    %v1490 = vld [vmem:[#allocation4 + $0x48] sm:$0xff]
    %v1491 = vld [vmem:[#allocation4 + $0x50] sm:$0xff]
    %v1492 = vld [vmem:[#allocation4 + $0x58] sm:$0xff]
    %v1493 = vld [vmem:[#allocation4 + $0x60] sm:$0xff]
    %v1494 = vld [vmem:[#allocation4 + $0x68] sm:$0xff]
    %v1495 = vld [vmem:[#allocation4 + $0x70] sm:$0xff]
    %v1496 = vld [vmem:[#allocation4 + $0x78] sm:$0xff]
    %v1497 = vld [vmem:[#allocation4 + $0x80] sm:$0xff]
    %v1498 = vld [vmem:[#allocation4 + $0x88] sm:$0xff]
    %v1499 = vld [vmem:[#allocation4 + $0x90] sm:$0xff]
    %v1500 = vld [vmem:[#allocation4 + $0x98] sm:$0xff]
    %v1501 = vld [vmem:[#allocation4 + $0xa0] sm:$0xff]
    %v1502 = vld [vmem:[#allocation4 + $0xa8] sm:$0xff]
    %v1503 = vld [vmem:[#allocation4 + $0xb0] sm:$0xff]
    %v1504 = vld [vmem:[#allocation4 + $0xb8] sm:$0xff]
    %v1505 = vld [vmem:[#allocation4 + $0xc0] sm:$0xff]
    %v1506 = vld [vmem:[#allocation4 + $0xc8] sm:$0xff]
    %v1507 = vld [vmem:[#allocation4 + $0xd0] sm:$0xff]
    %v1508 = vld [vmem:[#allocation4 + $0xd8] sm:$0xff]
    %v1509 = vld [vmem:[#allocation4 + $0xe0] sm:$0xff]
    %v1510 = vld [vmem:[#allocation4 + $0xe8] sm:$0xff]
    %v1511 = vld [vmem:[#allocation4 + $0xf0] sm:$0xff]
    %v1512 = vld [vmem:[#allocation4 + $0xf8] sm:$0xff]
    %v1513 = vld [vmem:[#allocation4 + $0x100] sm:$0xff]
    %v1514 = vld [vmem:[#allocation4 + $0x108] sm:$0xff]
    %v1515 = vld [vmem:[#allocation4 + $0x110] sm:$0xff]
    %v1516 = vld [vmem:[#allocation4 + $0x118] sm:$0xff]
    %v1517 = vld [vmem:[#allocation4 + $0x120] sm:$0xff]
    %v1518 = vld [vmem:[#allocation4 + $0x128] sm:$0xff]
    %v1519 = vld [vmem:[#allocation4 + $0x130] sm:$0xff]
    %v1520 = vld [vmem:[#allocation4 + $0x138] sm:$0xff]
    %v1521 = vld [vmem:[#allocation4 + $0x140] sm:$0xff]
    %v1522 = vld [vmem:[#allocation4 + $0x148] sm:$0xff]
    %v1523 = vld [vmem:[#allocation4 + $0x150] sm:$0xff]
    %v1524 = vld [vmem:[#allocation4 + $0x158] sm:$0xff]
    %v1525 = vld [vmem:[#allocation4 + $0x160] sm:$0xff]
    %v1526 = vld [vmem:[#allocation4 + $0x168] sm:$0xff]
    %v1527 = vld [vmem:[#allocation4 + $0x170] sm:$0xff]
    %v1528 = vld [vmem:[#allocation4 + $0x178] sm:$0xff]
    %1529 = vmatprep.subr.mxu0 %v1527
    %1530 = vmatpush1.msra.mxu0 %v1526
    %1531 = vmatprep.subr.mxu0 %v1524
    %1532 = vmatpush1.msra.mxu0 %v1523
    %1533 = vmatprep.subr.mxu0 %v1521
    %1534 = vmatpush1.msra.mxu0 %v1520
    %1535 = vmatprep.subr.mxu0 %v1518
    %1536 = vmatpush1.msra.mxu0 %v1517
    %1537 = vmatprep.subr.mxu0 %v1515
    %1538 = vmatpush1.msra.mxu0 %v1514
    %1539 = vmatprep.subr.mxu0 %v1512
    %1540 = vmatpush1.msra.mxu0 %v1511
    %1541 = vmatprep.subr.mxu0 %v1509
    %1542 = vmatpush1.msra.mxu0 %v1508
    %1543 = vmatprep.subr.mxu0 %v1506
    %1544 = vmatpush1.msra.mxu0 %v1505
    %1545 = vmatprep.subr.mxu0 %v1503
    %1546 = vmatpush1.msra.mxu0 %v1502
    %1547 = vmatprep.subr.mxu0 %v1500
    %1548 = vmatpush1.msra.mxu0 %v1499
    %1549 = vmatprep.subr.mxu0 %v1497
    %1550 = vmatpush1.msra.mxu0 %v1496
    %1551 = vmatprep.subr.mxu0 %v1494
    %1552 = vmatpush1.msra.mxu0 %v1493
    %1553 = vmatprep.subr.mxu0 %v1491
    %1554 = vmatpush1.msra.mxu0 %v1490
    %1555 = vmatprep.subr.mxu0 %v1488
    %1556 = vmatpush1.msra.mxu0 %v1487
    %1557 = vmatprep.subr.mxu0 %v1485
    %1558 = vmatpush1.msra.mxu0 %v1484
    %1559 = vmatprep.subr.mxu0 %v1482
    %1560 = vmatpush1.msra.mxu0 %v1481
    %1561 = vmatprep.subr.mxu0 0.0
    %1562 = vmatpush2.msra.mxu0 0.0
    %1563 = vmatprep.subr.mxu0 0.0
    %1564 = vmatpush2.msra.mxu0 0.0
    %1565 = vmatprep.subr.mxu0 0.0
    %1566 = vmatpush2.msra.mxu0 0.0
    %1567 = vmatprep.subr.mxu0 0.0
    %1568 = vmatpush2.msra.mxu0 0.0
    %1569 = vmatprep.subr.mxu0 0.0
    %1570 = vmatpush2.msra.mxu0 0.0
    %1571 = vmatprep.subr.mxu0 0.0
    %1572 = vmatpush2.msra.mxu0 0.0
    %1573 = vmatprep.subr.mxu0 0.0
    %1574 = vmatpush2.msra.mxu0 0.0
    %1575 = vmatprep.subr.mxu0 0.0
    %1576 = vmatpush2.msra.mxu0 0.0
    %1577 = vmatprep.subr.mxu0 0.0
    %1578 = vmatpush2.msra.mxu0 0.0
    %1579 = vmatprep.subr.mxu0 0.0
    %1580 = vmatpush2.msra.mxu0 0.0
    %1581 = vmatprep.subr.mxu0 0.0
    %1582 = vmatpush2.msra.mxu0 0.0
    %1583 = vmatprep.subr.mxu0 0.0
    %1584 = vmatpush2.msra.mxu0 0.0
    %1585 = vmatprep.subr.mxu0 0.0
    %1586 = vmatpush2.msra.mxu0 0.0
    %1587 = vmatprep.subr.mxu0 0.0
    %1588 = vmatpush2.msra.mxu0 0.0
    %1589 = vmatprep.subr.mxu0 0.0
    %1590 = vmatpush2.msra.mxu0 0.0
    %1591 = vmatprep.subr.mxu0 0.0
    %1592 = vmatpush2.msra.mxu0 0.0
    %1593 = vmatprep.mubr.f32.mxu0 0.0
    %1594 = vmatmul.mubr.f32.gmra.mxu0 %v1469
    %v1595 = vpop.f32.mrf.mxu0
    %v1596 = vadd.f32 0.0, %v1595
    %v1597 = vpop.f32.mrf.mxu0
    %v1598 = vadd.f32 0.0, %v1597
    %1599 = vdwg.mxu0
    %1600 = vmatprep.subr.mxu0 0.0
    %1601 = vmatpush1.msra.mxu0 %v1528
    %1602 = vmatprep.subr.mxu0 0.0
    %1603 = vmatpush1.msra.mxu0 %v1525
    %1604 = vmatprep.subr.mxu0 0.0
    %1605 = vmatpush1.msra.mxu0 %v1522
    %1606 = vmatprep.subr.mxu0 0.0
    %1607 = vmatpush1.msra.mxu0 %v1519
    %1608 = vmatprep.subr.mxu0 0.0
    %1609 = vmatpush1.msra.mxu0 %v1516
    %1610 = vmatprep.subr.mxu0 0.0
    %1611 = vmatpush1.msra.mxu0 %v1513
    %1612 = vmatprep.subr.mxu0 0.0
    %1613 = vmatpush1.msra.mxu0 %v1510
    %1614 = vmatprep.subr.mxu0 0.0
    %1615 = vmatpush1.msra.mxu0 %v1507
    %1616 = vmatprep.subr.mxu0 0.0
    %1617 = vmatpush1.msra.mxu0 %v1504
    %1618 = vmatprep.subr.mxu0 0.0
    %1619 = vmatpush1.msra.mxu0 %v1501
    %1620 = vmatprep.subr.mxu0 0.0
    %1621 = vmatpush1.msra.mxu0 %v1498
    %1622 = vmatprep.subr.mxu0 0.0
    %1623 = vmatpush1.msra.mxu0 %v1495
    %1624 = vmatprep.subr.mxu0 0.0
    %1625 = vmatpush1.msra.mxu0 %v1492
    %1626 = vmatprep.subr.mxu0 0.0
    %1627 = vmatpush1.msra.mxu0 %v1489
    %1628 = vmatprep.subr.mxu0 0.0
    %1629 = vmatpush1.msra.mxu0 %v1486
    %1630 = vmatprep.subr.mxu0 0.0
    %1631 = vmatpush1.msra.mxu0 %v1483
    %1632 = vmatprep.subr.mxu0 0.0
    %1633 = vmatpush2.msra.mxu0 0.0
    %1634 = vmatprep.subr.mxu0 0.0
    %1635 = vmatpush2.msra.mxu0 0.0
    %1636 = vmatprep.subr.mxu0 0.0
    %1637 = vmatpush2.msra.mxu0 0.0
    %1638 = vmatprep.subr.mxu0 0.0
    %1639 = vmatpush2.msra.mxu0 0.0
    %1640 = vmatprep.subr.mxu0 0.0
    %1641 = vmatpush2.msra.mxu0 0.0
    %1642 = vmatprep.subr.mxu0 0.0
    %1643 = vmatpush2.msra.mxu0 0.0
    %1644 = vmatprep.subr.mxu0 0.0
    %1645 = vmatpush2.msra.mxu0 0.0
    %1646 = vmatprep.subr.mxu0 0.0
    %1647 = vmatpush2.msra.mxu0 0.0
    %1648 = vmatprep.subr.mxu0 0.0
    %1649 = vmatpush2.msra.mxu0 0.0
    %1650 = vmatprep.subr.mxu0 0.0
    %1651 = vmatpush2.msra.mxu0 0.0
    %1652 = vmatprep.subr.mxu0 0.0
    %1653 = vmatpush2.msra.mxu0 0.0
    %1654 = vmatprep.subr.mxu0 0.0
    %1655 = vmatpush2.msra.mxu0 0.0
    %1656 = vmatprep.subr.mxu0 0.0
    %1657 = vmatpush2.msra.mxu0 0.0
    %1658 = vmatprep.subr.mxu0 0.0
    %1659 = vmatpush2.msra.mxu0 0.0
    %1660 = vmatprep.subr.mxu0 0.0
    %1661 = vmatpush2.msra.mxu0 0.0
    %1662 = vmatprep.subr.mxu0 0.0
    %1663 = vmatpush2.msra.mxu0 0.0
    %1664 = vmatprep.mubr.f32.mxu0 0.0
    %1665 = vmatmul.mubr.f32.gmra.mxu0 %v1469
    %v1666 = vpop.f32.mrf.mxu0
    %v1667 = vadd.f32 0.0, %v1666
    %v1668 = vpop.f32.mrf.mxu0
    %1669 = vdwg.mxu0
    %v1670 = vadd.f32 %v1478, %v1596
    %v1671 = vadd.f32 %v1479, %v1598
    %v1672 = vxor.u32 %v1670, 2147483648
    %v1673 = vxor.u32 %v1671, 2147483648
    %v1674 = vmul.f32 %v1672, 1.442695
    %v1675 = vpow.pop %v1674
    %v1676 = vmul.f32 %v1673, 1.442695
    %v1677 = vpow.pop %v1676
    %v1678 = vadd.f32 %v1675, 1.0
    %v1679 = vadd.f32 %v1677, 1.0
    %v1680 = vrcp.pop %v1678
    %v1681 = vmul.f32 1.0, %v1680
    %v1682 = vrcp.pop %v1679
    %v1683 = vmul.f32 1.0, %v1682
    %v1684 = vadd.f32 %v1667, %v364
    %v1685 = vmul.f32 %v1681, %v1684
    %v1686 = vadd.f32 %v1480, %v1685
    %v1687 = vtanh.pop %v1686
    %v1688 = vsub.f32 1.0, %v1683
    %v1689 = vmul.f32 %v1688, %v1687
    %v1690 = vmul.f32 %v1683, %v1469
    %v1691 = vadd.f32 %v1689, %v1690
    %s1692 = scalar_lea.vmem [#allocation3], 40
    %1693 = vst [vmem:[%s1692] sm:$0xff] %v1691
    %s1694 = sadd.s32 0, 48
    %s1695 = sshra.s32 %s1694, 3
    %s1696 = sand.u32 %s1694, 7
    %s1697 = smul.u32 %s1695, 3
    %s1698 = smul.addr %s1697, 8
    %s1699 = scalar_lea.vmem [#allocation2], %s1698
    %v1700 = vld [vmem:[%s1699] sm:$0xff]
    %v1701 = vld [vmem:[%s1699 + $0x8] sm:$0xff]
    %v1702 = vld [vmem:[%s1699 + $0x10] sm:$0xff]
    %v1703 = vld [vmem:[#allocation4] sm:$0xff]
    %v1704 = vld [vmem:[#allocation4 + $0x8] sm:$0xff]
    %v1705 = vld [vmem:[#allocation4 + $0x10] sm:$0xff]
    %v1706 = vld [vmem:[#allocation4 + $0x18] sm:$0xff]
    %v1707 = vld [vmem:[#allocation4 + $0x20] sm:$0xff]
    %v1708 = vld [vmem:[#allocation4 + $0x28] sm:$0xff]
    %v1709 = vld [vmem:[#allocation4 + $0x30] sm:$0xff]
    %v1710 = vld [vmem:[#allocation4 + $0x38] sm:$0xff]
    %v1711 = vld [vmem:[#allocation4 + $0x40] sm:$0xff]
    %v1712 = vld [vmem:[#allocation4 + $0x48] sm:$0xff]
    %v1713 = vld [vmem:[#allocation4 + $0x50] sm:$0xff]
    %v1714 = vld [vmem:[#allocation4 + $0x58] sm:$0xff]
    %v1715 = vld [vmem:[#allocation4 + $0x60] sm:$0xff]
    %v1716 = vld [vmem:[#allocation4 + $0x68] sm:$0xff]
    %v1717 = vld [vmem:[#allocation4 + $0x70] sm:$0xff]
    %v1718 = vld [vmem:[#allocation4 + $0x78] sm:$0xff]
    %v1719 = vld [vmem:[#allocation4 + $0x80] sm:$0xff]
    %v1720 = vld [vmem:[#allocation4 + $0x88] sm:$0xff]
    %v1721 = vld [vmem:[#allocation4 + $0x90] sm:$0xff]
    %v1722 = vld [vmem:[#allocation4 + $0x98] sm:$0xff]
    %v1723 = vld [vmem:[#allocation4 + $0xa0] sm:$0xff]
    %v1724 = vld [vmem:[#allocation4 + $0xa8] sm:$0xff]
    %v1725 = vld [vmem:[#allocation4 + $0xb0] sm:$0xff]
    %v1726 = vld [vmem:[#allocation4 + $0xb8] sm:$0xff]
    %v1727 = vld [vmem:[#allocation4 + $0xc0] sm:$0xff]
    %v1728 = vld [vmem:[#allocation4 + $0xc8] sm:$0xff]
    %v1729 = vld [vmem:[#allocation4 + $0xd0] sm:$0xff]
    %v1730 = vld [vmem:[#allocation4 + $0xd8] sm:$0xff]
    %v1731 = vld [vmem:[#allocation4 + $0xe0] sm:$0xff]
    %v1732 = vld [vmem:[#allocation4 + $0xe8] sm:$0xff]
    %v1733 = vld [vmem:[#allocation4 + $0xf0] sm:$0xff]
    %v1734 = vld [vmem:[#allocation4 + $0xf8] sm:$0xff]
    %v1735 = vld [vmem:[#allocation4 + $0x100] sm:$0xff]
    %v1736 = vld [vmem:[#allocation4 + $0x108] sm:$0xff]
    %v1737 = vld [vmem:[#allocation4 + $0x110] sm:$0xff]
    %v1738 = vld [vmem:[#allocation4 + $0x118] sm:$0xff]
    %v1739 = vld [vmem:[#allocation4 + $0x120] sm:$0xff]
    %v1740 = vld [vmem:[#allocation4 + $0x128] sm:$0xff]
    %v1741 = vld [vmem:[#allocation4 + $0x130] sm:$0xff]
    %v1742 = vld [vmem:[#allocation4 + $0x138] sm:$0xff]
    %v1743 = vld [vmem:[#allocation4 + $0x140] sm:$0xff]
    %v1744 = vld [vmem:[#allocation4 + $0x148] sm:$0xff]
    %v1745 = vld [vmem:[#allocation4 + $0x150] sm:$0xff]
    %v1746 = vld [vmem:[#allocation4 + $0x158] sm:$0xff]
    %v1747 = vld [vmem:[#allocation4 + $0x160] sm:$0xff]
    %v1748 = vld [vmem:[#allocation4 + $0x168] sm:$0xff]
    %v1749 = vld [vmem:[#allocation4 + $0x170] sm:$0xff]
    %v1750 = vld [vmem:[#allocation4 + $0x178] sm:$0xff]
    %1751 = vmatprep.subr.mxu0 %v1749
    %1752 = vmatpush1.msra.mxu0 %v1748
    %1753 = vmatprep.subr.mxu0 %v1746
    %1754 = vmatpush1.msra.mxu0 %v1745
    %1755 = vmatprep.subr.mxu0 %v1743
    %1756 = vmatpush1.msra.mxu0 %v1742
    %1757 = vmatprep.subr.mxu0 %v1740
    %1758 = vmatpush1.msra.mxu0 %v1739
    %1759 = vmatprep.subr.mxu0 %v1737
    %1760 = vmatpush1.msra.mxu0 %v1736
    %1761 = vmatprep.subr.mxu0 %v1734
    %1762 = vmatpush1.msra.mxu0 %v1733
    %1763 = vmatprep.subr.mxu0 %v1731
    %1764 = vmatpush1.msra.mxu0 %v1730
    %1765 = vmatprep.subr.mxu0 %v1728
    %1766 = vmatpush1.msra.mxu0 %v1727
    %1767 = vmatprep.subr.mxu0 %v1725
    %1768 = vmatpush1.msra.mxu0 %v1724
    %1769 = vmatprep.subr.mxu0 %v1722
    %1770 = vmatpush1.msra.mxu0 %v1721
    %1771 = vmatprep.subr.mxu0 %v1719
    %1772 = vmatpush1.msra.mxu0 %v1718
    %1773 = vmatprep.subr.mxu0 %v1716
    %1774 = vmatpush1.msra.mxu0 %v1715
    %1775 = vmatprep.subr.mxu0 %v1713
    %1776 = vmatpush1.msra.mxu0 %v1712
    %1777 = vmatprep.subr.mxu0 %v1710
    %1778 = vmatpush1.msra.mxu0 %v1709
    %1779 = vmatprep.subr.mxu0 %v1707
    %1780 = vmatpush1.msra.mxu0 %v1706
    %1781 = vmatprep.subr.mxu0 %v1704
    %1782 = vmatpush1.msra.mxu0 %v1703
    %1783 = vmatprep.subr.mxu0 0.0
    %1784 = vmatpush2.msra.mxu0 0.0
    %1785 = vmatprep.subr.mxu0 0.0
    %1786 = vmatpush2.msra.mxu0 0.0
    %1787 = vmatprep.subr.mxu0 0.0
    %1788 = vmatpush2.msra.mxu0 0.0
    %1789 = vmatprep.subr.mxu0 0.0
    %1790 = vmatpush2.msra.mxu0 0.0
    %1791 = vmatprep.subr.mxu0 0.0
    %1792 = vmatpush2.msra.mxu0 0.0
    %1793 = vmatprep.subr.mxu0 0.0
    %1794 = vmatpush2.msra.mxu0 0.0
    %1795 = vmatprep.subr.mxu0 0.0
    %1796 = vmatpush2.msra.mxu0 0.0
    %1797 = vmatprep.subr.mxu0 0.0
    %1798 = vmatpush2.msra.mxu0 0.0
    %1799 = vmatprep.subr.mxu0 0.0
    %1800 = vmatpush2.msra.mxu0 0.0
    %1801 = vmatprep.subr.mxu0 0.0
    %1802 = vmatpush2.msra.mxu0 0.0
    %1803 = vmatprep.subr.mxu0 0.0
    %1804 = vmatpush2.msra.mxu0 0.0
    %1805 = vmatprep.subr.mxu0 0.0
    %1806 = vmatpush2.msra.mxu0 0.0
    %1807 = vmatprep.subr.mxu0 0.0
    %1808 = vmatpush2.msra.mxu0 0.0
    %1809 = vmatprep.subr.mxu0 0.0
    %1810 = vmatpush2.msra.mxu0 0.0
    %1811 = vmatprep.subr.mxu0 0.0
    %1812 = vmatpush2.msra.mxu0 0.0
    %1813 = vmatprep.subr.mxu0 0.0
    %1814 = vmatpush2.msra.mxu0 0.0
    %1815 = vmatprep.mubr.f32.mxu0 0.0
    %1816 = vmatmul.mubr.f32.gmra.mxu0 %v1691
    %v1817 = vpop.f32.mrf.mxu0
    %v1818 = vadd.f32 0.0, %v1817
    %v1819 = vpop.f32.mrf.mxu0
    %v1820 = vadd.f32 0.0, %v1819
    %1821 = vdwg.mxu0
    %1822 = vmatprep.subr.mxu0 0.0
    %1823 = vmatpush1.msra.mxu0 %v1750
    %1824 = vmatprep.subr.mxu0 0.0
    %1825 = vmatpush1.msra.mxu0 %v1747
    %1826 = vmatprep.subr.mxu0 0.0
    %1827 = vmatpush1.msra.mxu0 %v1744
    %1828 = vmatprep.subr.mxu0 0.0
    %1829 = vmatpush1.msra.mxu0 %v1741
    %1830 = vmatprep.subr.mxu0 0.0
    %1831 = vmatpush1.msra.mxu0 %v1738
    %1832 = vmatprep.subr.mxu0 0.0
    %1833 = vmatpush1.msra.mxu0 %v1735
    %1834 = vmatprep.subr.mxu0 0.0
    %1835 = vmatpush1.msra.mxu0 %v1732
    %1836 = vmatprep.subr.mxu0 0.0
    %1837 = vmatpush1.msra.mxu0 %v1729
    %1838 = vmatprep.subr.mxu0 0.0
    %1839 = vmatpush1.msra.mxu0 %v1726
    %1840 = vmatprep.subr.mxu0 0.0
    %1841 = vmatpush1.msra.mxu0 %v1723
    %1842 = vmatprep.subr.mxu0 0.0
    %1843 = vmatpush1.msra.mxu0 %v1720
    %1844 = vmatprep.subr.mxu0 0.0
    %1845 = vmatpush1.msra.mxu0 %v1717
    %1846 = vmatprep.subr.mxu0 0.0
    %1847 = vmatpush1.msra.mxu0 %v1714
    %1848 = vmatprep.subr.mxu0 0.0
    %1849 = vmatpush1.msra.mxu0 %v1711
    %1850 = vmatprep.subr.mxu0 0.0
    %1851 = vmatpush1.msra.mxu0 %v1708
    %1852 = vmatprep.subr.mxu0 0.0
    %1853 = vmatpush1.msra.mxu0 %v1705
    %1854 = vmatprep.subr.mxu0 0.0
    %1855 = vmatpush2.msra.mxu0 0.0
    %1856 = vmatprep.subr.mxu0 0.0
    %1857 = vmatpush2.msra.mxu0 0.0
    %1858 = vmatprep.subr.mxu0 0.0
    %1859 = vmatpush2.msra.mxu0 0.0
    %1860 = vmatprep.subr.mxu0 0.0
    %1861 = vmatpush2.msra.mxu0 0.0
    %1862 = vmatprep.subr.mxu0 0.0
    %1863 = vmatpush2.msra.mxu0 0.0
    %1864 = vmatprep.subr.mxu0 0.0
    %1865 = vmatpush2.msra.mxu0 0.0
    %1866 = vmatprep.subr.mxu0 0.0
    %1867 = vmatpush2.msra.mxu0 0.0
    %1868 = vmatprep.subr.mxu0 0.0
    %1869 = vmatpush2.msra.mxu0 0.0
    %1870 = vmatprep.subr.mxu0 0.0
    %1871 = vmatpush2.msra.mxu0 0.0
    %1872 = vmatprep.subr.mxu0 0.0
    %1873 = vmatpush2.msra.mxu0 0.0
    %1874 = vmatprep.subr.mxu0 0.0
    %1875 = vmatpush2.msra.mxu0 0.0
    %1876 = vmatprep.subr.mxu0 0.0
    %1877 = vmatpush2.msra.mxu0 0.0
    %1878 = vmatprep.subr.mxu0 0.0
    %1879 = vmatpush2.msra.mxu0 0.0
    %1880 = vmatprep.subr.mxu0 0.0
    %1881 = vmatpush2.msra.mxu0 0.0
    %1882 = vmatprep.subr.mxu0 0.0
    %1883 = vmatpush2.msra.mxu0 0.0
    %1884 = vmatprep.subr.mxu0 0.0
    %1885 = vmatpush2.msra.mxu0 0.0
    %1886 = vmatprep.mubr.f32.mxu0 0.0
    %1887 = vmatmul.mubr.f32.gmra.mxu0 %v1691
    %v1888 = vpop.f32.mrf.mxu0
    %v1889 = vadd.f32 0.0, %v1888
    %v1890 = vpop.f32.mrf.mxu0
    %1891 = vdwg.mxu0
    %v1892 = vadd.f32 %v1700, %v1818
    %v1893 = vadd.f32 %v1701, %v1820
    %v1894 = vxor.u32 %v1892, 2147483648
    %v1895 = vxor.u32 %v1893, 2147483648
    %v1896 = vmul.f32 %v1894, 1.442695
    %v1897 = vpow.pop %v1896
    %v1898 = vmul.f32 %v1895, 1.442695
    %v1899 = vpow.pop %v1898
    %v1900 = vadd.f32 %v1897, 1.0
    %v1901 = vadd.f32 %v1899, 1.0
    %v1902 = vrcp.pop %v1900
    %v1903 = vmul.f32 1.0, %v1902
    %v1904 = vrcp.pop %v1901
    %v1905 = vmul.f32 1.0, %v1904
    %v1906 = vadd.f32 %v1889, %v364
    %v1907 = vmul.f32 %v1903, %v1906
    %v1908 = vadd.f32 %v1702, %v1907
    %v1909 = vtanh.pop %v1908
    %v1910 = vsub.f32 1.0, %v1905
    %v1911 = vmul.f32 %v1910, %v1909
    %v1912 = vmul.f32 %v1905, %v1691
    %v1913 = vadd.f32 %v1911, %v1912
    %s1914 = scalar_lea.vmem [#allocation3], 48
    %1915 = vst [vmem:[%s1914] sm:$0xff] %v1913
    %s1916 = sadd.s32 0, 56
    %s1917 = sshra.s32 %s1916, 3
    %s1918 = sand.u32 %s1916, 7
    %s1919 = smul.u32 %s1917, 3
    %s1920 = smul.addr %s1919, 8
    %s1921 = scalar_lea.vmem [#allocation2], %s1920
    %v1922 = vld [vmem:[%s1921] sm:$0xff]
    %v1923 = vld [vmem:[%s1921 + $0x8] sm:$0xff]
    %v1924 = vld [vmem:[%s1921 + $0x10] sm:$0xff]
    %v1925 = vld [vmem:[#allocation4] sm:$0xff]
    %v1926 = vld [vmem:[#allocation4 + $0x8] sm:$0xff]
    %v1927 = vld [vmem:[#allocation4 + $0x10] sm:$0xff]
    %v1928 = vld [vmem:[#allocation4 + $0x18] sm:$0xff]
    %v1929 = vld [vmem:[#allocation4 + $0x20] sm:$0xff]
    %v1930 = vld [vmem:[#allocation4 + $0x28] sm:$0xff]
    %v1931 = vld [vmem:[#allocation4 + $0x30] sm:$0xff]
    %v1932 = vld [vmem:[#allocation4 + $0x38] sm:$0xff]
    %v1933 = vld [vmem:[#allocation4 + $0x40] sm:$0xff]
    %v1934 = vld [vmem:[#allocation4 + $0x48] sm:$0xff]
    %v1935 = vld [vmem:[#allocation4 + $0x50] sm:$0xff]
    %v1936 = vld [vmem:[#allocation4 + $0x58] sm:$0xff]
    %v1937 = vld [vmem:[#allocation4 + $0x60] sm:$0xff]
    %v1938 = vld [vmem:[#allocation4 + $0x68] sm:$0xff]
    %v1939 = vld [vmem:[#allocation4 + $0x70] sm:$0xff]
    %v1940 = vld [vmem:[#allocation4 + $0x78] sm:$0xff]
    %v1941 = vld [vmem:[#allocation4 + $0x80] sm:$0xff]
    %v1942 = vld [vmem:[#allocation4 + $0x88] sm:$0xff]
    %v1943 = vld [vmem:[#allocation4 + $0x90] sm:$0xff]
    %v1944 = vld [vmem:[#allocation4 + $0x98] sm:$0xff]
    %v1945 = vld [vmem:[#allocation4 + $0xa0] sm:$0xff]
    %v1946 = vld [vmem:[#allocation4 + $0xa8] sm:$0xff]
    %v1947 = vld [vmem:[#allocation4 + $0xb0] sm:$0xff]
    %v1948 = vld [vmem:[#allocation4 + $0xb8] sm:$0xff]
    %v1949 = vld [vmem:[#allocation4 + $0xc0] sm:$0xff]
    %v1950 = vld [vmem:[#allocation4 + $0xc8] sm:$0xff]
    %v1951 = vld [vmem:[#allocation4 + $0xd0] sm:$0xff]
    %v1952 = vld [vmem:[#allocation4 + $0xd8] sm:$0xff]
    %v1953 = vld [vmem:[#allocation4 + $0xe0] sm:$0xff]
    %v1954 = vld [vmem:[#allocation4 + $0xe8] sm:$0xff]
    %v1955 = vld [vmem:[#allocation4 + $0xf0] sm:$0xff]
    %v1956 = vld [vmem:[#allocation4 + $0xf8] sm:$0xff]
    %v1957 = vld [vmem:[#allocation4 + $0x100] sm:$0xff]
    %v1958 = vld [vmem:[#allocation4 + $0x108] sm:$0xff]
    %v1959 = vld [vmem:[#allocation4 + $0x110] sm:$0xff]
    %v1960 = vld [vmem:[#allocation4 + $0x118] sm:$0xff]
    %v1961 = vld [vmem:[#allocation4 + $0x120] sm:$0xff]
    %v1962 = vld [vmem:[#allocation4 + $0x128] sm:$0xff]
    %v1963 = vld [vmem:[#allocation4 + $0x130] sm:$0xff]
    %v1964 = vld [vmem:[#allocation4 + $0x138] sm:$0xff]
    %v1965 = vld [vmem:[#allocation4 + $0x140] sm:$0xff]
    %v1966 = vld [vmem:[#allocation4 + $0x148] sm:$0xff]
    %v1967 = vld [vmem:[#allocation4 + $0x150] sm:$0xff]
    %v1968 = vld [vmem:[#allocation4 + $0x158] sm:$0xff]
    %v1969 = vld [vmem:[#allocation4 + $0x160] sm:$0xff]
    %v1970 = vld [vmem:[#allocation4 + $0x168] sm:$0xff]
    %v1971 = vld [vmem:[#allocation4 + $0x170] sm:$0xff]
    %v1972 = vld [vmem:[#allocation4 + $0x178] sm:$0xff]
    %1973 = vmatprep.subr.mxu0 %v1971
    %1974 = vmatpush1.msra.mxu0 %v1970
    %1975 = vmatprep.subr.mxu0 %v1968
    %1976 = vmatpush1.msra.mxu0 %v1967
    %1977 = vmatprep.subr.mxu0 %v1965
    %1978 = vmatpush1.msra.mxu0 %v1964
    %1979 = vmatprep.subr.mxu0 %v1962
    %1980 = vmatpush1.msra.mxu0 %v1961
    %1981 = vmatprep.subr.mxu0 %v1959
    %1982 = vmatpush1.msra.mxu0 %v1958
    %1983 = vmatprep.subr.mxu0 %v1956
    %1984 = vmatpush1.msra.mxu0 %v1955
    %1985 = vmatprep.subr.mxu0 %v1953
    %1986 = vmatpush1.msra.mxu0 %v1952
    %1987 = vmatprep.subr.mxu0 %v1950
    %1988 = vmatpush1.msra.mxu0 %v1949
    %1989 = vmatprep.subr.mxu0 %v1947
    %1990 = vmatpush1.msra.mxu0 %v1946
    %1991 = vmatprep.subr.mxu0 %v1944
    %1992 = vmatpush1.msra.mxu0 %v1943
    %1993 = vmatprep.subr.mxu0 %v1941
    %1994 = vmatpush1.msra.mxu0 %v1940
    %1995 = vmatprep.subr.mxu0 %v1938
    %1996 = vmatpush1.msra.mxu0 %v1937
    %1997 = vmatprep.subr.mxu0 %v1935
    %1998 = vmatpush1.msra.mxu0 %v1934
    %1999 = vmatprep.subr.mxu0 %v1932
    %2000 = vmatpush1.msra.mxu0 %v1931
    %2001 = vmatprep.subr.mxu0 %v1929
    %2002 = vmatpush1.msra.mxu0 %v1928
    %2003 = vmatprep.subr.mxu0 %v1926
    %2004 = vmatpush1.msra.mxu0 %v1925
    %2005 = vmatprep.subr.mxu0 0.0
    %2006 = vmatpush2.msra.mxu0 0.0
    %2007 = vmatprep.subr.mxu0 0.0
    %2008 = vmatpush2.msra.mxu0 0.0
    %2009 = vmatprep.subr.mxu0 0.0
    %2010 = vmatpush2.msra.mxu0 0.0
    %2011 = vmatprep.subr.mxu0 0.0
    %2012 = vmatpush2.msra.mxu0 0.0
    %2013 = vmatprep.subr.mxu0 0.0
    %2014 = vmatpush2.msra.mxu0 0.0
    %2015 = vmatprep.subr.mxu0 0.0
    %2016 = vmatpush2.msra.mxu0 0.0
    %2017 = vmatprep.subr.mxu0 0.0
    %2018 = vmatpush2.msra.mxu0 0.0
    %2019 = vmatprep.subr.mxu0 0.0
    %2020 = vmatpush2.msra.mxu0 0.0
    %2021 = vmatprep.subr.mxu0 0.0
    %2022 = vmatpush2.msra.mxu0 0.0
    %2023 = vmatprep.subr.mxu0 0.0
    %2024 = vmatpush2.msra.mxu0 0.0
    %2025 = vmatprep.subr.mxu0 0.0
    %2026 = vmatpush2.msra.mxu0 0.0
    %2027 = vmatprep.subr.mxu0 0.0
    %2028 = vmatpush2.msra.mxu0 0.0
    %2029 = vmatprep.subr.mxu0 0.0
    %2030 = vmatpush2.msra.mxu0 0.0
    %2031 = vmatprep.subr.mxu0 0.0
    %2032 = vmatpush2.msra.mxu0 0.0
    %2033 = vmatprep.subr.mxu0 0.0
    %2034 = vmatpush2.msra.mxu0 0.0
    %2035 = vmatprep.subr.mxu0 0.0
    %2036 = vmatpush2.msra.mxu0 0.0
    %2037 = vmatprep.mubr.f32.mxu0 0.0
    %2038 = vmatmul.mubr.f32.gmra.mxu0 %v1913
    %v2039 = vpop.f32.mrf.mxu0
    %v2040 = vadd.f32 0.0, %v2039
    %v2041 = vpop.f32.mrf.mxu0
    %v2042 = vadd.f32 0.0, %v2041
    %2043 = vdwg.mxu0
    %2044 = vmatprep.subr.mxu0 0.0
    %2045 = vmatpush1.msra.mxu0 %v1972
    %2046 = vmatprep.subr.mxu0 0.0
    %2047 = vmatpush1.msra.mxu0 %v1969
    %2048 = vmatprep.subr.mxu0 0.0
    %2049 = vmatpush1.msra.mxu0 %v1966
    %2050 = vmatprep.subr.mxu0 0.0
    %2051 = vmatpush1.msra.mxu0 %v1963
    %2052 = vmatprep.subr.mxu0 0.0
    %2053 = vmatpush1.msra.mxu0 %v1960
    %2054 = vmatprep.subr.mxu0 0.0
    %2055 = vmatpush1.msra.mxu0 %v1957
    %2056 = vmatprep.subr.mxu0 0.0
    %2057 = vmatpush1.msra.mxu0 %v1954
    %2058 = vmatprep.subr.mxu0 0.0
    %2059 = vmatpush1.msra.mxu0 %v1951
    %2060 = vmatprep.subr.mxu0 0.0
    %2061 = vmatpush1.msra.mxu0 %v1948
    %2062 = vmatprep.subr.mxu0 0.0
    %2063 = vmatpush1.msra.mxu0 %v1945
    %2064 = vmatprep.subr.mxu0 0.0
    %2065 = vmatpush1.msra.mxu0 %v1942
    %2066 = vmatprep.subr.mxu0 0.0
    %2067 = vmatpush1.msra.mxu0 %v1939
    %2068 = vmatprep.subr.mxu0 0.0
    %2069 = vmatpush1.msra.mxu0 %v1936
    %2070 = vmatprep.subr.mxu0 0.0
    %2071 = vmatpush1.msra.mxu0 %v1933
    %2072 = vmatprep.subr.mxu0 0.0
    %2073 = vmatpush1.msra.mxu0 %v1930
    %2074 = vmatprep.subr.mxu0 0.0
    %2075 = vmatpush1.msra.mxu0 %v1927
    %2076 = vmatprep.subr.mxu0 0.0
    %2077 = vmatpush2.msra.mxu0 0.0
    %2078 = vmatprep.subr.mxu0 0.0
    %2079 = vmatpush2.msra.mxu0 0.0
    %2080 = vmatprep.subr.mxu0 0.0
    %2081 = vmatpush2.msra.mxu0 0.0
    %2082 = vmatprep.subr.mxu0 0.0
    %2083 = vmatpush2.msra.mxu0 0.0
    %2084 = vmatprep.subr.mxu0 0.0
    %2085 = vmatpush2.msra.mxu0 0.0
    %2086 = vmatprep.subr.mxu0 0.0
    %2087 = vmatpush2.msra.mxu0 0.0
    %2088 = vmatprep.subr.mxu0 0.0
    %2089 = vmatpush2.msra.mxu0 0.0
    %2090 = vmatprep.subr.mxu0 0.0
    %2091 = vmatpush2.msra.mxu0 0.0
    %2092 = vmatprep.subr.mxu0 0.0
    %2093 = vmatpush2.msra.mxu0 0.0
    %2094 = vmatprep.subr.mxu0 0.0
    %2095 = vmatpush2.msra.mxu0 0.0
    %2096 = vmatprep.subr.mxu0 0.0
    %2097 = vmatpush2.msra.mxu0 0.0
    %2098 = vmatprep.subr.mxu0 0.0
    %2099 = vmatpush2.msra.mxu0 0.0
    %2100 = vmatprep.subr.mxu0 0.0
    %2101 = vmatpush2.msra.mxu0 0.0
    %2102 = vmatprep.subr.mxu0 0.0
    %2103 = vmatpush2.msra.mxu0 0.0
    %2104 = vmatprep.subr.mxu0 0.0
    %2105 = vmatpush2.msra.mxu0 0.0
    %2106 = vmatprep.subr.mxu0 0.0
    %2107 = vmatpush2.msra.mxu0 0.0
    %2108 = vmatprep.mubr.f32.mxu0 0.0
    %2109 = vmatmul.mubr.f32.gmra.mxu0 %v1913
    %v2110 = vpop.f32.mrf.mxu0
    %v2111 = vadd.f32 0.0, %v2110
    %v2112 = vpop.f32.mrf.mxu0
    %2113 = vdwg.mxu0
    %v2114 = vadd.f32 %v1922, %v2040
    %v2115 = vadd.f32 %v1923, %v2042
    %v2116 = vxor.u32 %v2114, 2147483648
    %v2117 = vxor.u32 %v2115, 2147483648
    %v2118 = vmul.f32 %v2116, 1.442695
    %v2119 = vpow.pop %v2118
    %v2120 = vmul.f32 %v2117, 1.442695
    %v2121 = vpow.pop %v2120
    %v2122 = vadd.f32 %v2119, 1.0
    %v2123 = vadd.f32 %v2121, 1.0
    %v2124 = vrcp.pop %v2122
    %v2125 = vmul.f32 1.0, %v2124
    %v2126 = vrcp.pop %v2123
    %v2127 = vmul.f32 1.0, %v2126
    %v2128 = vadd.f32 %v2111, %v364
    %v2129 = vmul.f32 %v2125, %v2128
    %v2130 = vadd.f32 %v1924, %v2129
    %v2131 = vtanh.pop %v2130
    %v2132 = vsub.f32 1.0, %v2127
    %v2133 = vmul.f32 %v2132, %v2131
    %v2134 = vmul.f32 %v2127, %v1913
    %v2135 = vadd.f32 %v2133, %v2134
    %s2136 = scalar_lea.vmem [#allocation3], 56
    %2137 = vst [vmem:[%s2136] sm:$0xff] %v2135
    %v2138 = vld [vmem:[#allocation3] sm:$0xff]
    %v2139 = vld [vmem:[#allocation3 + $0x8] sm:$0xff]
    %v2140 = vld [vmem:[#allocation3 + $0x10] sm:$0xff]
    %v2141 = vld [vmem:[#allocation3 + $0x18] sm:$0xff]
    %v2142 = vld [vmem:[#allocation3 + $0x20] sm:$0xff]
    %v2143 = vld [vmem:[#allocation3 + $0x28] sm:$0xff]
    %v2144 = vld [vmem:[#allocation3 + $0x30] sm:$0xff]
    %v2145 = vld [vmem:[#allocation3 + $0x38] sm:$0xff]
    %v2146 = vld [vmem:[#allocation7] sm:$0xff]
    %v2147 = vld [vmem:[#allocation7 + $0x8] sm:$0xff]
    %v2148 = vld [vmem:[#allocation7 + $0x10] sm:$0xff]
    %v2149 = vld [vmem:[#allocation7 + $0x18] sm:$0xff]
    %v2150 = vld [vmem:[#allocation7 + $0x20] sm:$0xff]
    %v2151 = vld [vmem:[#allocation7 + $0x28] sm:$0xff]
    %v2152 = vld [vmem:[#allocation7 + $0x30] sm:$0xff]
    %v2153 = vld [vmem:[#allocation7 + $0x38] sm:$0xff]
    %v2154 = vld [vmem:[#allocation7 + $0x40] sm:$0xff]
    %v2155 = vld [vmem:[#allocation7 + $0x48] sm:$0xff]
    %v2156 = vld [vmem:[#allocation7 + $0x50] sm:$0xff]
    %v2157 = vld [vmem:[#allocation7 + $0x58] sm:$0xff]
    %v2158 = vld [vmem:[#allocation7 + $0x60] sm:$0xff]
    %v2159 = vld [vmem:[#allocation7 + $0x68] sm:$0xff]
    %v2160 = vld [vmem:[#allocation7 + $0x70] sm:$0xff]
    %v2161 = vld [vmem:[#allocation7 + $0x78] sm:$0xff]
    %v2162 = vld [vmem:[%s6] sm:$0x1]
    %v2164 = vlaneseq
    %v2165 = vshrl.u32 %v2164, 7
    %v2166 = vsub.s32 0, %v2165
    %v2167 = vrot.slane %v2162, %v2166
    %2169 = vmatprep.subr.mxu0 0.0
    %2170 = vmatpush1.msra.mxu0 %v2161
    %2171 = vmatprep.subr.mxu0 0.0
    %2172 = vmatpush1.msra.mxu0 %v2160
    %2173 = vmatprep.subr.mxu0 0.0
    %2174 = vmatpush1.msra.mxu0 %v2159
    %2175 = vmatprep.subr.mxu0 0.0
    %2176 = vmatpush1.msra.mxu0 %v2158
    %2177 = vmatprep.subr.mxu0 0.0
    %2178 = vmatpush1.msra.mxu0 %v2157
    %2179 = vmatprep.subr.mxu0 0.0
    %2180 = vmatpush1.msra.mxu0 %v2156
    %2181 = vmatprep.subr.mxu0 0.0
    %2182 = vmatpush1.msra.mxu0 %v2155
    %2183 = vmatprep.subr.mxu0 0.0
    %2184 = vmatpush1.msra.mxu0 %v2154
    %2185 = vmatprep.subr.mxu0 0.0
    %2186 = vmatpush1.msra.mxu0 %v2153
    %2187 = vmatprep.subr.mxu0 0.0
    %2188 = vmatpush1.msra.mxu0 %v2152
    %2189 = vmatprep.subr.mxu0 0.0
    %2190 = vmatpush1.msra.mxu0 %v2151
    %2191 = vmatprep.subr.mxu0 0.0
    %2192 = vmatpush1.msra.mxu0 %v2150
    %2193 = vmatprep.subr.mxu0 0.0
    %2194 = vmatpush1.msra.mxu0 %v2149
    %2195 = vmatprep.subr.mxu0 0.0
    %2196 = vmatpush1.msra.mxu0 %v2148
    %2197 = vmatprep.subr.mxu0 0.0
    %2198 = vmatpush1.msra.mxu0 %v2147
    %2199 = vmatprep.subr.mxu0 0.0
    %2200 = vmatpush1.msra.mxu0 %v2146
    %2201 = vmatprep.subr.mxu0 0.0
    %2202 = vmatpush2.msra.mxu0 0.0
    %2203 = vmatprep.subr.mxu0 0.0
    %2204 = vmatpush2.msra.mxu0 0.0
    %2205 = vmatprep.subr.mxu0 0.0
    %2206 = vmatpush2.msra.mxu0 0.0
    %2207 = vmatprep.subr.mxu0 0.0
    %2208 = vmatpush2.msra.mxu0 0.0
    %2209 = vmatprep.subr.mxu0 0.0
    %2210 = vmatpush2.msra.mxu0 0.0
    %2211 = vmatprep.subr.mxu0 0.0
    %2212 = vmatpush2.msra.mxu0 0.0
    %2213 = vmatprep.subr.mxu0 0.0
    %2214 = vmatpush2.msra.mxu0 0.0
    %2215 = vmatprep.subr.mxu0 0.0
    %2216 = vmatpush2.msra.mxu0 0.0
    %2217 = vmatprep.subr.mxu0 0.0
    %2218 = vmatpush2.msra.mxu0 0.0
    %2219 = vmatprep.subr.mxu0 0.0
    %2220 = vmatpush2.msra.mxu0 0.0
    %2221 = vmatprep.subr.mxu0 0.0
    %2222 = vmatpush2.msra.mxu0 0.0
    %2223 = vmatprep.subr.mxu0 0.0
    %2224 = vmatpush2.msra.mxu0 0.0
    %2225 = vmatprep.subr.mxu0 0.0
    %2226 = vmatpush2.msra.mxu0 0.0
    %2227 = vmatprep.subr.mxu0 0.0
    %2228 = vmatpush2.msra.mxu0 0.0
    %2229 = vmatprep.subr.mxu0 0.0
    %2230 = vmatpush2.msra.mxu0 0.0
    %2231 = vmatprep.subr.mxu0 0.0
    %2232 = vmatpush2.msra.mxu0 0.0
    %2233 = vmatprep.mubr.f32.mxu0 0.0
    %2234 = vmatmul.mubr.f32.gmra.mxu0 %v2138
    %v2235 = vpop.f32.mrf.mxu0
    %v2236 = vadd.f32 %v2167, %v2235
    %v2237 = vpop.f32.mrf.mxu0
    %2238 = vmatprep.mubr.f32.mxu0 0.0
    %2239 = vmatmul.mubr.f32.gmra.mxu0 %v2139
    %v2240 = vpop.f32.mrf.mxu0
    %v2241 = vadd.f32 %v2167, %v2240
    %v2242 = vpop.f32.mrf.mxu0
    %2243 = vmatprep.mubr.f32.mxu0 0.0
    %2244 = vmatmul.mubr.f32.gmra.mxu0 %v2140
    %v2245 = vpop.f32.mrf.mxu0
    %v2246 = vadd.f32 %v2167, %v2245
    %v2247 = vpop.f32.mrf.mxu0
    %2248 = vmatprep.mubr.f32.mxu0 0.0
    %2249 = vmatmul.mubr.f32.gmra.mxu0 %v2141
    %v2250 = vpop.f32.mrf.mxu0
    %v2251 = vadd.f32 %v2167, %v2250
    %v2252 = vpop.f32.mrf.mxu0
    %2253 = vmatprep.mubr.f32.mxu0 0.0
    %2254 = vmatmul.mubr.f32.gmra.mxu0 %v2142
    %v2255 = vpop.f32.mrf.mxu0
    %v2256 = vadd.f32 %v2167, %v2255
    %v2257 = vpop.f32.mrf.mxu0
    %2258 = vmatprep.mubr.f32.mxu0 0.0
    %2259 = vmatmul.mubr.f32.gmra.mxu0 %v2143
    %v2260 = vpop.f32.mrf.mxu0
    %v2261 = vadd.f32 %v2167, %v2260
    %v2262 = vpop.f32.mrf.mxu0
    %2263 = vmatprep.mubr.f32.mxu0 0.0
    %2264 = vmatmul.mubr.f32.gmra.mxu0 %v2144
    %v2265 = vpop.f32.mrf.mxu0
    %v2266 = vadd.f32 %v2167, %v2265
    %v2267 = vpop.f32.mrf.mxu0
    %2268 = vmatprep.mubr.f32.mxu0 0.0
    %2269 = vmatmul.mubr.f32.gmra.mxu0 %v2145
    %v2270 = vpop.f32.mrf.mxu0
    %v2271 = vadd.f32 %v2167, %v2270
    %v2272 = vpop.f32.mrf.mxu0
    %2273 = vdwg.mxu0
    %2274 = vst [vmem:[#allocation9] sm:$0xff] %v2236
    %2275 = vst [vmem:[#allocation9 + $0x8] sm:$0xff] %v2241
    %2276 = vst [vmem:[#allocation9 + $0x10] sm:$0xff] %v2246
    %2277 = vst [vmem:[#allocation9 + $0x18] sm:$0xff] %v2251
    %2278 = vst [vmem:[#allocation9 + $0x20] sm:$0xff] %v2256
    %2279 = vst [vmem:[#allocation9 + $0x28] sm:$0xff] %v2261
    %2280 = vst [vmem:[#allocation9 + $0x30] sm:$0xff] %v2266
    %2281 = vst [vmem:[#allocation9 + $0x38] sm:$0xff] %v2271
    // Predicated region
    $region38: #{tpu_custom_call.1} parent=1 // pred_check
      _
    $region39: #{tpu_custom_call.1} parent=1 // pred_check_branch
      %2283 = sbr.rel (0) target = $region41
    $region40: #{tpu_custom_call.1} parent=1 // pred_region
      %s2285 = ssub.s32 1024, 1024
      %2286 = vsyncadd [#allocation6], %s2285
      %s2287 = sshll.u32 [#allocation9], 4
      %s2288 = int_to_ptr.vmem [resolvable:$true] %s2287
      %2293 = dma.vmem_to_hbm [thread:$0]  %s2288, 1024, %s7, [#allocation6], 128, 128, 8
    $region41: #{tpu_custom_call.1} parent=1 // pred_fallthru
      _
    // Predicated region
    $region42: #{tpu_custom_call.1} parent=1 // pred_check
      _
    $region43: #{tpu_custom_call.1} parent=1 // pred_check_branch
      %2295 = sbr.rel (0) target = $region45
    $region44: #{tpu_custom_call.1} parent=1 // pred_region
      %2296 = dma.done [#allocation6], 1024
    $region45: #{tpu_custom_call.1} parent=1 // pred_fallthru
      _
    %2297 = vsyncpa [#allocation5], 1
    %2298 = vsyncpa [#allocation8], 1
    %2299 = vsyncpa [#allocation6], 1

</llo_original>
